<compile_context>
chip_gen: v5e
topology: v5e:2x2
jax: 0.10.0
libtpu: 0.0.40
codegen_flags: <defaults>
</compile_context>

<pallas_src>
import functools

import jax
import jax.numpy as jnp
from jax.experimental import pallas as pl
from jax.experimental.pallas import tpu as pltpu


def _round_up(x, m):
    return (x + m - 1) // m * m


def _pick_divisor(n_pad, candidates, prefer_multi=False):
    """Largest candidate that divides n_pad (optionally requiring >= 2 tiles)."""
    for c in candidates:
        if c <= n_pad and n_pad % c == 0 and (not prefer_multi or n_pad // c >= 2):
            return c
    return min(candidates[-1], n_pad)


def _vmem_limit(raw_bytes):
    # Explicit scoped-VMEM budget: >= actual need with 2x margin, floor 32 MiB
    # (above v5e's 16 MiB default), cap 48 MiB (under v7x's 64 MiB physical).
    return int(min(max(2 * raw_bytes, 32 << 20), 48 << 20))


# ---------------------------------------------------------------------------
# Kernel 1: projection  XW = X @ W   (row-tiled, feature dims fully in VMEM)
# ---------------------------------------------------------------------------
def _project_kernel(x_ref, w_ref, o_ref):
    o_ref[...] = jnp.dot(x_ref[...], w_ref[...],
                         preferred_element_type=jnp.float32).astype(o_ref.dtype)


def _project(x_pad, w_pad, *, tile_m):
    n_pad, c_in_pad = x_pad.shape
    c_out_pad = w_pad.shape[1]
    raw = (2 * tile_m * c_in_pad + c_in_pad * c_out_pad
           + 2 * tile_m * c_out_pad) * 4
    return pl.pallas_call(
        _project_kernel,
        out_shape=jax.ShapeDtypeStruct((n_pad, c_out_pad), jnp.float32),
        grid_spec=pltpu.PrefetchScalarGridSpec(
            num_scalar_prefetch=0,
            grid=(n_pad // tile_m,),
            in_specs=[
                pl.BlockSpec((tile_m, c_in_pad), lambda i: (i, 0)),
                pl.BlockSpec((c_in_pad, c_out_pad), lambda i: (0, 0)),
            ],
            out_specs=pl.BlockSpec((tile_m, c_out_pad), lambda i: (i, 0)),
        ),
        compiler_params=pltpu.CompilerParams(
            dimension_semantics=("parallel",),
            vmem_limit_bytes=_vmem_limit(raw)),
    )(x_pad, w_pad)


# ---------------------------------------------------------------------------
# Kernel 2: aggregation  H = A @ XW + b, fused relu / log_softmax
#   grid = (row_tiles, neighbor_tiles); acc is a float32 VMEM scratch of width
#   Cout_pad that lives across the (arbitrary) reduction axis.
# ---------------------------------------------------------------------------
def _aggregate_kernel(a_ref, xw_ref, b_ref, o_ref, acc_ref, *, mode, c_out_valid):
    k = pl.program_id(1)

    @pl.when(k == 0)
    def _():
        acc_ref[...] = jnp.zeros_like(acc_ref)

    # Neighbor aggregation for this (row tile, neighbor tile): MXU, fp32 accum.
    acc_ref[...] += jnp.dot(a_ref[...], xw_ref[...],
                            preferred_element_type=jnp.float32)

    @pl.when(k == pl.num_programs(1) - 1)
    def _():
        h = acc_ref[...] + b_ref[...]
        if mode == "relu":
            h = jnp.maximum(h, 0.0)
        else:  # log_softmax over the *valid* output columns only
            c_out_pad = h.shape[-1]
            if c_out_valid < c_out_pad:
                col = jax.lax.broadcasted_iota(jnp.int32, h.shape, 1)
                h = jnp.where(col < c_out_valid, h, jnp.float32(-1e30))
            m = jnp.max(h, axis=-1, keepdims=True)
            s = h - m
            h = s - jnp.log(jnp.sum(jnp.exp(s), axis=-1, keepdims=True))
        o_ref[...] = h.astype(o_ref.dtype)


def _aggregate(a_pad, xw_pad, b_pad, *, mode, c_out_valid, tile_m, tile_k):
    n_pad = a_pad.shape[0]
    c_out_pad = xw_pad.shape[1]
    kernel = functools.partial(_aggregate_kernel, mode=mode,
                               c_out_valid=c_out_valid)
    raw = (2 * tile_m * tile_k + 2 * tile_k * c_out_pad
           + tile_m * c_out_pad + 2 * tile_m * c_out_pad) * 4
    return pl.pallas_call(
        kernel,
        out_shape=jax.ShapeDtypeStruct((n_pad, c_out_pad), jnp.float32),
        grid_spec=pltpu.PrefetchScalarGridSpec(
            num_scalar_prefetch=0,
            grid=(n_pad // tile_m, n_pad // tile_k),
            in_specs=[
                pl.BlockSpec((tile_m, tile_k), lambda i, k: (i, k)),
                pl.BlockSpec((tile_k, c_out_pad), lambda i, k: (k, 0)),
                pl.BlockSpec((1, c_out_pad), lambda i, k: (0, 0)),
            ],
            out_specs=pl.BlockSpec((tile_m, c_out_pad), lambda i, k: (i, 0)),
            scratch_shapes=[pltpu.VMEM((tile_m, c_out_pad), jnp.float32)],
        ),
        compiler_params=pltpu.CompilerParams(
            dimension_semantics=("parallel", "arbitrary"),
            vmem_limit_bytes=_vmem_limit(raw)),
    )(a_pad, xw_pad, b_pad)


# ---------------------------------------------------------------------------
# Whole-model forward (jitted); weight/bias padding hoisted to a prepare step.
# ---------------------------------------------------------------------------
@functools.partial(
    jax.jit,
    static_argnames=("dims", "n", "n_pad", "tile_m", "tile_k", "tile_p"))
def _gcn_forward_core(x, a, w_pads, b_pads, *, dims, n, n_pad,
                      tile_m, tile_k, tile_p):
    num_layers = len(dims)
    c_in = dims[0][0]
    c_in_pad = w_pads[0].shape[0]
    a_pad = jnp.pad(a.astype(jnp.float32), ((0, n_pad - n), (0, n_pad - n)))
    h = jnp.pad(x.astype(jnp.float32), ((0, n_pad - n), (0, c_in_pad - c_in)))

    for l in range(num_layers):
        xw = _project(h, w_pads[l], tile_m=tile_p)
        mode = "log_softmax" if l == num_layers - 1 else "relu"
        h = _aggregate(a_pad, xw, b_pads[l], mode=mode,
                       c_out_valid=dims[l][1], tile_m=tile_m, tile_k=tile_k)
        # TODO(synk): training-mode dropout (random mask via pltpu.prng_*) not
        # implemented; forward matches eval()/inference semantics.

    return h[:n, :dims[-1][1]]


def gcn_forward(params, x, a, dropout_p=0.5):
    """Inference forward. `a` is the dense adj_t used exactly as supplied
    (GCNConv(normalize=False))."""
    n, _ = x.shape
    n_pad = _round_up(n, 128)
    # >=256-wide neighbor tiles for the 256-wide MXUs (v6e/v7x); row tiles kept
    # to >=2 so the "parallel" axis gives both v7x TensorCores work.
    tile_k = _pick_divisor(n_pad, (512, 256, 128))
    tile_m = _pick_divisor(n_pad, (1024, 512, 256, 128), prefer_multi=True)
    tile_p = _pick_divisor(n_pad, (1024, 512, 256, 128), prefer_multi=True)

    dims, w_pads, b_pads = [], [], []
    for w_t, b in params:
        cin, cout = w_t.shape
        cin_pad, cout_pad = _round_up(cin, 128), _round_up(cout, 128)
        w_pads.append(jnp.pad(w_t, ((0, cin_pad - cin), (0, cout_pad - cout))))
        b_pads.append(jnp.pad(b, (0, cout_pad - cout)).reshape(1, cout_pad))
        dims.append((cin, cout))

    return _gcn_forward_core(x, a, tuple(w_pads), tuple(b_pads),
                             dims=tuple(dims), n=n, n_pad=n_pad,
                             tile_m=tile_m, tile_k=tile_k, tile_p=tile_p)


# ---------------------------------------------------------------------------
# Parameter init + pure-JAX reference
# ---------------------------------------------------------------------------
def init_gcn_params(key, in_channels, hidden_channels, out_channels, num_layers):
    dims = [in_channels] + [hidden_channels] * (num_layers - 1) + [out_channels]
    params = []
    for l in range(num_layers):
        cin, cout = dims[l], dims[l + 1]
        key, k1, k2 = jax.random.split(key, 3)
        scale = 1.0 / jnp.sqrt(jnp.float32(cin))
        w = jax.random.uniform(k1, (cout, cin), jnp.float32, -scale, scale)
        b = jax.random.uniform(k2, (cout,), jnp.float32, -scale, scale)
        # pre-transpose so kernels do [*, Cin] @ [Cin, Cout]
        params.append((w.T, b))
    return params


def gcn_reference(params, x, a):
    num_layers = len(params)
    for l, (w_t, b) in enumerate(params):
        h = a @ (x @ w_t) + b[None, :]
        if l < num_layers - 1:
            x = jnp.maximum(h, 0.0)
        else:
            x = jax.nn.log_softmax(h, axis=-1)
    return x


if __name__ == "__main__":
    # Small deterministic problem (N not a multiple of 128, odd feature dims,
    # so padding / masking paths are exercised; n_pad=256 -> tile_m=128 (2 row
    # tiles), tile_k=256).
    N = 200
    in_channels = 100
    hidden_channels = 64
    out_channels = 40
    num_layers = 3
    dropout = 0.5

    key = jax.random.PRNGKey(0)
    key, kx, ka, kp = jax.random.split(key, 4)

    # node features
    x = jax.random.normal(kx, (N, in_channels), jnp.float32)

    # random undirected adjacency (no self loops), pre-normalized offline
    # (GCNConv(normalize=False) uses adj_t exactly as supplied).
    adj = (jax.random.uniform(ka, (N, N)) < 0.05).astype(jnp.float32)
    adj = jnp.maximum(adj, adj.T)
    adj = adj * (1.0 - jnp.eye(N, dtype=jnp.float32))
    deg = jnp.sum(adj, axis=1, keepdims=True)
    a_norm = adj / jnp.maximum(deg, 1.0)

    params = init_gcn_params(kp, in_channels, hidden_channels,
                             out_channels, num_layers)

    out = gcn_forward(params, x, a_norm, dropout_p=dropout)
    out = jax.block_until_ready(out)

    ref = gcn_reference(params, x, a_norm)
    assert out.shape == (N, out_channels)
    assert jnp.allclose(out, ref, atol=1e-4, rtol=1e-4), "mismatch vs reference"
    # log_softmax rows should sum (in prob space) to 1
    assert jnp.allclose(jnp.sum(jnp.exp(out), axis=-1), 1.0, atol=1e-4)

    print("KERNEL_OK")
</pallas_src>

<mosaic_0001>
module attributes {stable_mosaic.version = 11 : i64} {
  func.func @_project_kernel(%arg0: i32, %arg1: memref<128x128xf32, #tpu.memory_space<vmem>>, %arg2: memref<128x128xf32, #tpu.memory_space<vmem>>, %arg3: memref<128x128xf32, #tpu.memory_space<vmem>>) attributes {dimension_semantics = [#tpu.dimension_semantics<parallel>], iteration_bounds = array<i64: 2>, scalar_prefetch = 0 : i64, scratch_operands = 0 : i64, tpu.core_type = #tpu.core_type<tc>, window_params = [{transform_indices = @transform_0, window_bounds = array<i64: 128, 128>}, {pipeline_mode = #tpu.pipeline_mode<synchronous>, transform_indices = @transform_1, window_bounds = array<i64: 128, 128>}, {transform_indices = @transform_2, window_bounds = array<i64: 128, 128>}]} {
    %c0 = arith.constant 0 : index
    %c0_0 = arith.constant 0 : index
    %0 = vector.load %arg1[%c0, %c0_0] : memref<128x128xf32, #tpu.memory_space<vmem>>, vector<128x128xf32>
    %c0_1 = arith.constant 0 : index
    %c0_2 = arith.constant 0 : index
    %1 = vector.load %arg2[%c0_1, %c0_2] : memref<128x128xf32, #tpu.memory_space<vmem>>, vector<128x128xf32>
    %cst = arith.constant dense<0.000000e+00> : vector<128x128xf32>
    %2 = tpu.matmul %0, %1, %cst {dimension_numbers = #tpu.dot_dimension_numbers<[1], [0], [0], [1], [0, 0, 1, 1], [], []>} : vector<128x128xf32>, vector<128x128xf32>, vector<128x128xf32> -> vector<128x128xf32>
    %c0_3 = arith.constant 0 : index
    %c0_4 = arith.constant 0 : index
    %3 = vector.load %arg3[%c0_3, %c0_4] : memref<128x128xf32, #tpu.memory_space<vmem>>, vector<128x128xf32>
    tpu.vector_store %arg3[%c0_3, %c0_4], %2 {strides = array<i32>} : memref<128x128xf32, #tpu.memory_space<vmem>>, vector<128x128xf32>,
    return
  }
  func.func @transform_0(%arg0: i32) -> (i32, i32) {
    %c0_i32 = arith.constant 0 : i32
    %c0_i32_0 = arith.constant 0 : i32
    return %arg0, %c0_i32 : i32, i32
  }
  func.func @transform_1(%arg0: i32) -> (i32, i32) {
    %c0_i32 = arith.constant 0 : i32
    %c0_i32_0 = arith.constant 0 : i32
    %c0_i32_1 = arith.constant 0 : i32
    return %c0_i32, %c0_i32_0 : i32, i32
  }
  func.func @transform_2(%arg0: i32) -> (i32, i32) {
    %c0_i32 = arith.constant 0 : i32
    %c0_i32_0 = arith.constant 0 : i32
    return %arg0, %c0_i32 : i32, i32
  }
}

module attributes {stable_mosaic.version = 11 : i64} {
  func.func @_aggregate_kernel(%arg0: i32, %arg1: i32, %arg2: memref<128x256xf32, #tpu.memory_space<vmem>>, %arg3: memref<256x128xf32, #tpu.memory_space<vmem>>, %arg4: memref<1x128xf32, #tpu.memory_space<vmem>>, %arg5: memref<128x128xf32, #tpu.memory_space<vmem>>, %arg6: memref<128x128xf32, #tpu.memory_space<vmem>>) attributes {dimension_semantics = [#tpu.dimension_semantics<parallel>, #tpu.dimension_semantics<arbitrary>], iteration_bounds = array<i64: 2, 1>, scalar_prefetch = 0 : i64, scratch_operands = 1 : i64, tpu.core_type = #tpu.core_type<tc>, window_params = [{transform_indices = @transform_0, window_bounds = array<i64: 128, 256>}, {transform_indices = @transform_1, window_bounds = array<i64: 256, 128>}, {pipeline_mode = #tpu.pipeline_mode<synchronous>, transform_indices = @transform_2, window_bounds = array<i64: 1, 128>}, {transform_indices = @transform_3, window_bounds = array<i64: 128, 128>}]} {
    %c0_i32 = arith.constant 0 : i32
    %0 = arith.cmpi eq, %arg1, %c0_i32 : i32
    %1 = arith.extui %0 : i1 to i32
    %c0_i32_0 = arith.constant 0 : i32
    %2 = arith.cmpi ne, %1, %c0_i32_0 : i32
    scf.if %2 {
      %cst_10 = arith.constant 0.000000e+00 : f32
      %12 = vector.broadcast %cst_10 : f32 to vector<128x128xf32>
      %c0_11 = arith.constant 0 : index
      %c0_12 = arith.constant 0 : index
      %13 = vector.load %arg6[%c0_11, %c0_12] : memref<128x128xf32, #tpu.memory_space<vmem>>, vector<128x128xf32>
      tpu.vector_store %arg6[%c0_11, %c0_12], %12 {strides = array<i32>} : memref<128x128xf32, #tpu.memory_space<vmem>>, vector<128x128xf32>,
    } else {
    }
    %c0 = arith.constant 0 : index
    %c0_1 = arith.constant 0 : index
    %3 = vector.load %arg6[%c0, %c0_1] : memref<128x128xf32, #tpu.memory_space<vmem>>, vector<128x128xf32>
    %c0_2 = arith.constant 0 : index
    %c0_3 = arith.constant 0 : index
    %4 = vector.load %arg2[%c0_2, %c0_3] : memref<128x256xf32, #tpu.memory_space<vmem>>, vector<128x256xf32>
    %c0_4 = arith.constant 0 : index
    %c0_5 = arith.constant 0 : index
    %5 = vector.load %arg3[%c0_4, %c0_5] : memref<256x128xf32, #tpu.memory_space<vmem>>, vector<256x128xf32>
    %cst = arith.constant dense<0.000000e+00> : vector<128x128xf32>
    %6 = tpu.matmul %4, %5, %cst {dimension_numbers = #tpu.dot_dimension_numbers<[1], [0], [0], [1], [0, 0, 1, 1], [], []>} : vector<128x256xf32>, vector<256x128xf32>, vector<128x128xf32> -> vector<128x128xf32>
    %7 = arith.addf %3, %6 : vector<128x128xf32>
    %c0_6 = arith.constant 0 : index
    %c0_7 = arith.constant 0 : index
    %8 = vector.load %arg6[%c0_6, %c0_7] : memref<128x128xf32, #tpu.memory_space<vmem>>, vector<128x128xf32>
    tpu.vector_store %arg6[%c0_6, %c0_7], %7 {strides = array<i32>} : memref<128x128xf32, #tpu.memory_space<vmem>>, vector<128x128xf32>,
    %c0_i32_8 = arith.constant 0 : i32
    %9 = arith.cmpi eq, %arg1, %c0_i32_8 : i32
    %10 = arith.extui %9 : i1 to i32
    %c0_i32_9 = arith.constant 0 : i32
    %11 = arith.cmpi ne, %10, %c0_i32_9 : i32
    scf.if %11 {
      %c0_10 = arith.constant 0 : index
      %c0_11 = arith.constant 0 : index
      %12 = vector.load %arg6[%c0_10, %c0_11] : memref<128x128xf32, #tpu.memory_space<vmem>>, vector<128x128xf32>
      %c0_12 = arith.constant 0 : index
      %c0_13 = arith.constant 0 : index
      %13 = vector.load %arg4[%c0_12, %c0_13] : memref<1x128xf32, #tpu.memory_space<vmem>>, vector<1x128xf32>
      %14 = vector.broadcast %13 : vector<1x128xf32> to vector<128x128xf32>
      %15 = arith.addf %12, %14 : vector<128x128xf32>
      %cst_14 = arith.constant 0.000000e+00 : f32
      %16 = vector.broadcast %cst_14 : f32 to vector<128x128xf32>
      %17 = arith.maximumf %15, %16 : vector<128x128xf32>
      %c0_15 = arith.constant 0 : index
      %c0_16 = arith.constant 0 : index
      %18 = vector.load %arg5[%c0_15, %c0_16] : memref<128x128xf32, #tpu.memory_space<vmem>>, vector<128x128xf32>
      tpu.vector_store %arg5[%c0_15, %c0_16], %17 {strides = array<i32>} : memref<128x128xf32, #tpu.memory_space<vmem>>, vector<128x128xf32>,
    } else {
    }
    return
  }
  func.func @transform_0(%arg0: i32, %arg1: i32) -> (i32, i32) {
    %c0_i32 = arith.constant 0 : i32
    return %arg0, %arg1 : i32, i32
  }
  func.func @transform_1(%arg0: i32, %arg1: i32) -> (i32, i32) {
    %c0_i32 = arith.constant 0 : i32
    %c0_i32_0 = arith.constant 0 : i32
    return %arg1, %c0_i32 : i32, i32
  }
  func.func @transform_2(%arg0: i32, %arg1: i32) -> (i32, i32) {
    %c0_i32 = arith.constant 0 : i32
    %c0_i32_0 = arith.constant 0 : i32
    %c0_i32_1 = arith.constant 0 : i32
    return %c0_i32, %c0_i32_0 : i32, i32
  }
  func.func @transform_3(%arg0: i32, %arg1: i32) -> (i32, i32) {
    %c0_i32 = arith.constant 0 : i32
    %c0_i32_0 = arith.constant 0 : i32
    return %arg0, %c0_i32 : i32, i32
  }
}

module attributes {stable_mosaic.version = 11 : i64} {
  func.func @_project_kernel(%arg0: i32, %arg1: memref<128x128xf32, #tpu.memory_space<vmem>>, %arg2: memref<128x128xf32, #tpu.memory_space<vmem>>, %arg3: memref<128x128xf32, #tpu.memory_space<vmem>>) attributes {dimension_semantics = [#tpu.dimension_semantics<parallel>], iteration_bounds = array<i64: 2>, scalar_prefetch = 0 : i64, scratch_operands = 0 : i64, tpu.core_type = #tpu.core_type<tc>, window_params = [{transform_indices = @transform_0, window_bounds = array<i64: 128, 128>}, {pipeline_mode = #tpu.pipeline_mode<synchronous>, transform_indices = @transform_1, window_bounds = array<i64: 128, 128>}, {transform_indices = @transform_2, window_bounds = array<i64: 128, 128>}]} {
    %c0 = arith.constant 0 : index
    %c0_0 = arith.constant 0 : index
    %0 = vector.load %arg1[%c0, %c0_0] : memref<128x128xf32, #tpu.memory_space<vmem>>, vector<128x128xf32>
    %c0_1 = arith.constant 0 : index
    %c0_2 = arith.constant 0 : index
    %1 = vector.load %arg2[%c0_1, %c0_2] : memref<128x128xf32, #tpu.memory_space<vmem>>, vector<128x128xf32>
    %cst = arith.constant dense<0.000000e+00> : vector<128x128xf32>
    %2 = tpu.matmul %0, %1, %cst {dimension_numbers = #tpu.dot_dimension_numbers<[1], [0], [0], [1], [0, 0, 1, 1], [], []>} : vector<128x128xf32>, vector<128x128xf32>, vector<128x128xf32> -> vector<128x128xf32>
    %c0_3 = arith.constant 0 : index
    %c0_4 = arith.constant 0 : index
    %3 = vector.load %arg3[%c0_3, %c0_4] : memref<128x128xf32, #tpu.memory_space<vmem>>, vector<128x128xf32>
    tpu.vector_store %arg3[%c0_3, %c0_4], %2 {strides = array<i32>} : memref<128x128xf32, #tpu.memory_space<vmem>>, vector<128x128xf32>,
    return
  }
  func.func @transform_0(%arg0: i32) -> (i32, i32) {
    %c0_i32 = arith.constant 0 : i32
    %c0_i32_0 = arith.constant 0 : i32
    return %arg0, %c0_i32 : i32, i32
  }
  func.func @transform_1(%arg0: i32) -> (i32, i32) {
    %c0_i32 = arith.constant 0 : i32
    %c0_i32_0 = arith.constant 0 : i32
    %c0_i32_1 = arith.constant 0 : i32
    return %c0_i32, %c0_i32_0 : i32, i32
  }
  func.func @transform_2(%arg0: i32) -> (i32, i32) {
    %c0_i32 = arith.constant 0 : i32
    %c0_i32_0 = arith.constant 0 : i32
    return %arg0, %c0_i32 : i32, i32
  }
}

module attributes {stable_mosaic.version = 11 : i64} {
  func.func @_aggregate_kernel(%arg0: i32, %arg1: i32, %arg2: memref<128x256xf32, #tpu.memory_space<vmem>>, %arg3: memref<256x128xf32, #tpu.memory_space<vmem>>, %arg4: memref<1x128xf32, #tpu.memory_space<vmem>>, %arg5: memref<128x128xf32, #tpu.memory_space<vmem>>, %arg6: memref<128x128xf32, #tpu.memory_space<vmem>>) attributes {dimension_semantics = [#tpu.dimension_semantics<parallel>, #tpu.dimension_semantics<arbitrary>], iteration_bounds = array<i64: 2, 1>, scalar_prefetch = 0 : i64, scratch_operands = 1 : i64, tpu.core_type = #tpu.core_type<tc>, window_params = [{transform_indices = @transform_0, window_bounds = array<i64: 128, 256>}, {transform_indices = @transform_1, window_bounds = array<i64: 256, 128>}, {pipeline_mode = #tpu.pipeline_mode<synchronous>, transform_indices = @transform_2, window_bounds = array<i64: 1, 128>}, {transform_indices = @transform_3, window_bounds = array<i64: 128, 128>}]} {
    %c0_i32 = arith.constant 0 : i32
    %0 = arith.cmpi eq, %arg1, %c0_i32 : i32
    %1 = arith.extui %0 : i1 to i32
    %c0_i32_0 = arith.constant 0 : i32
    %2 = arith.cmpi ne, %1, %c0_i32_0 : i32
    scf.if %2 {
      %cst_10 = arith.constant 0.000000e+00 : f32
      %12 = vector.broadcast %cst_10 : f32 to vector<128x128xf32>
      %c0_11 = arith.constant 0 : index
      %c0_12 = arith.constant 0 : index
      %13 = vector.load %arg6[%c0_11, %c0_12] : memref<128x128xf32, #tpu.memory_space<vmem>>, vector<128x128xf32>
      tpu.vector_store %arg6[%c0_11, %c0_12], %12 {strides = array<i32>} : memref<128x128xf32, #tpu.memory_space<vmem>>, vector<128x128xf32>,
    } else {
    }
    %c0 = arith.constant 0 : index
    %c0_1 = arith.constant 0 : index
    %3 = vector.load %arg6[%c0, %c0_1] : memref<128x128xf32, #tpu.memory_space<vmem>>, vector<128x128xf32>
    %c0_2 = arith.constant 0 : index
    %c0_3 = arith.constant 0 : index
    %4 = vector.load %arg2[%c0_2, %c0_3] : memref<128x256xf32, #tpu.memory_space<vmem>>, vector<128x256xf32>
    %c0_4 = arith.constant 0 : index
    %c0_5 = arith.constant 0 : index
    %5 = vector.load %arg3[%c0_4, %c0_5] : memref<256x128xf32, #tpu.memory_space<vmem>>, vector<256x128xf32>
    %cst = arith.constant dense<0.000000e+00> : vector<128x128xf32>
    %6 = tpu.matmul %4, %5, %cst {dimension_numbers = #tpu.dot_dimension_numbers<[1], [0], [0], [1], [0, 0, 1, 1], [], []>} : vector<128x256xf32>, vector<256x128xf32>, vector<128x128xf32> -> vector<128x128xf32>
    %7 = arith.addf %3, %6 : vector<128x128xf32>
    %c0_6 = arith.constant 0 : index
    %c0_7 = arith.constant 0 : index
    %8 = vector.load %arg6[%c0_6, %c0_7] : memref<128x128xf32, #tpu.memory_space<vmem>>, vector<128x128xf32>
    tpu.vector_store %arg6[%c0_6, %c0_7], %7 {strides = array<i32>} : memref<128x128xf32, #tpu.memory_space<vmem>>, vector<128x128xf32>,
    %c0_i32_8 = arith.constant 0 : i32
    %9 = arith.cmpi eq, %arg1, %c0_i32_8 : i32
    %10 = arith.extui %9 : i1 to i32
    %c0_i32_9 = arith.constant 0 : i32
    %11 = arith.cmpi ne, %10, %c0_i32_9 : i32
    scf.if %11 {
      %c0_10 = arith.constant 0 : index
      %c0_11 = arith.constant 0 : index
      %12 = vector.load %arg6[%c0_10, %c0_11] : memref<128x128xf32, #tpu.memory_space<vmem>>, vector<128x128xf32>
      %c0_12 = arith.constant 0 : index
      %c0_13 = arith.constant 0 : index
      %13 = vector.load %arg4[%c0_12, %c0_13] : memref<1x128xf32, #tpu.memory_space<vmem>>, vector<1x128xf32>
      %14 = vector.broadcast %13 : vector<1x128xf32> to vector<128x128xf32>
      %15 = arith.addf %12, %14 : vector<128x128xf32>
      %16 = tpu.iota {dimensions = array<i32: 1>} : vector<128x128xi32>
      %c40_i32 = arith.constant 40 : i32
      %17 = vector.broadcast %c40_i32 : i32 to vector<128x128xi32>
      %18 = arith.cmpi slt, %16, %17 : vector<128x128xi32>
      %cst_14 = arith.constant -1.000000e+30 : f32
      %19 = vector.broadcast %cst_14 : f32 to vector<128x128xf32>
      %20 = arith.select %18, %15, %19 : vector<128x128xi1>, vector<128x128xf32>
      %cst_15 = arith.constant dense<0xFF800000> : vector<128xf32>
      %21 = vector.multi_reduction <maximumf>, %20, %cst_15 [1] : vector<128x128xf32> to vector<128xf32>
      %22 = vector.shape_cast %21 : vector<128xf32> to vector<128x1xf32>
      %23 = vector.broadcast %22 : vector<128x1xf32> to vector<128x128xf32>
      %24 = arith.subf %20, %23 : vector<128x128xf32>
      %25 = math.exp %24 : vector<128x128xf32>
      %cst_16 = arith.constant dense<0.000000e+00> : vector<128xf32>
      %26 = vector.multi_reduction <add>, %25, %cst_16 [1] : vector<128x128xf32> to vector<128xf32>
      %27 = vector.shape_cast %26 : vector<128xf32> to vector<128x1xf32>
      %28 = math.log %27 : vector<128x1xf32>
      %29 = vector.broadcast %28 : vector<128x1xf32> to vector<128x128xf32>
      %30 = arith.subf %24, %29 : vector<128x128xf32>
      %c0_17 = arith.constant 0 : index
      %c0_18 = arith.constant 0 : index
      %31 = vector.load %arg5[%c0_17, %c0_18] : memref<128x128xf32, #tpu.memory_space<vmem>>, vector<128x128xf32>
      tpu.vector_store %arg5[%c0_17, %c0_18], %30 {strides = array<i32>} : memref<128x128xf32, #tpu.memory_space<vmem>>, vector<128x128xf32>,
    } else {
    }
    return
  }
  func.func @transform_0(%arg0: i32, %arg1: i32) -> (i32, i32) {
    %c0_i32 = arith.constant 0 : i32
    return %arg0, %arg1 : i32, i32
  }
  func.func @transform_1(%arg0: i32, %arg1: i32) -> (i32, i32) {
    %c0_i32 = arith.constant 0 : i32
    %c0_i32_0 = arith.constant 0 : i32
    return %arg1, %c0_i32 : i32, i32
  }
  func.func @transform_2(%arg0: i32, %arg1: i32) -> (i32, i32) {
    %c0_i32 = arith.constant 0 : i32
    %c0_i32_0 = arith.constant 0 : i32
    %c0_i32_1 = arith.constant 0 : i32
    return %c0_i32, %c0_i32_0 : i32, i32
  }
  func.func @transform_3(%arg0: i32, %arg1: i32) -> (i32, i32) {
    %c0_i32 = arith.constant 0 : i32
    %c0_i32_0 = arith.constant 0 : i32
    return %arg0, %c0_i32 : i32, i32
  }
}

</mosaic_0001>

<llo_original>
// kernel: _gcn_forward_core.6
$region0: #{_gcn_forward_core.6}
  #allocation0 [shape = 'u32[]', space=smem, size = 0x4, offset = 0x4, fixed_abs, tag = 'smem constant byte address 0x4 - core index']
  #allocation1 [shape = 'u32[72,128]{1,0:T(1,128)}', space=vmem, size = 0x9000, scoped, tag = 'internal scratch']
  %s0 = inlined_call_operand.vmem [shape: f32[256,128], index: 0, kind: input, shape index: {}]
  %s1 = inlined_call_operand.hbm [shape: f32[128,128], index: 1, kind: input, shape index: {}]
  %s2 = inlined_call_operand.vmem [shape: f32[256,128], index: 2, kind: output, shape index: {}]
  %s3 = sld [smem:[#allocation0]]
  $region45: #{_gcn_forward_core.6} parent=0
    _
  %s5 = ssub.s32 1, %s3
  %s6 = scalar_select 0, %s5, %s3
  $region1: #{_gcn_forward_core.6} parent=0
    #allocation2 [shape = 'u8[65536]{0}', space=vmem, size = 0x10000, scoped, tag = 'input window, operand 1, single buffered']
    #allocation3 [shape = 's32[2]{0}', space=sflag, size = 0x8, scoped, tag = 'scoped memory for _gcn_forward_core.6']
    %7 = vsyncpa [#allocation3], 0
    loop: start=0, step=1, limit=4
    $region2: #{_gcn_forward_core.6} parent=1 // loop_pre_header
      _
    $region3: #{_gcn_forward_core.6} parent=1 // loop_header
      %s9 = sphi 0, %s13
      %p10 = scmp.ge.s32.totalorder %s9, 4
      %s19 = sphi 0, %s21
      %s22 = sphi 0, %s19
      %s23 = sphi 0, %s22
      %s39 = sphi 0, %s23
      %s43 = sphi 0, %s43
      %s45 = sphi 0, %s43
      %s46 = sphi 0, %s45
      %s60 = sphi 0, %s46
      %s66 = sphi 0, %s68
      %s69 = sphi 0, %s66
      %s70 = sphi 0, %s69
      %s86 = sphi 0, %s70
    $region4: #{_gcn_forward_core.6} parent=1 // loop_header_branch
      %12 = sbr.rel (%p10) target = $region8
    $region5: #{_gcn_forward_core.6} parent=1 // loop_body
      %s14 = ssub.s32 %s9, 1
      %s15 = ssub.s32 %s9, 2
      %s16 = sadd.s32 %s9, 1
      %s17 = ssub.s32 %s9, %s16
      %p18 = scmp.eq.s32.totalorder %s17, 0
      %s20 = sadd.s32 %s19, 1
      %s21 = scalar_select %p18, %s19, %s20
      %p24 = pneg %p18
      %p25 = scmp.eq.s32.totalorder %s9, 1
      %p26 = por %p24, %p25
      %p27 = scmp.ne.s32.totalorder %s19, %s22
      %p28 = scmp.eq.s32.totalorder %s9, 0
      %p29 = por %p27, %p28
      %p30 = scmp.ne.s32.totalorder %s19, %s22
      %p31 = scmp.eq.s32.totalorder %s14, 1
      %p32 = por %p30, %p31
      %p33 = scmp.ne.s32.totalorder %s22, %s23
      %p34 = scmp.eq.s32.totalorder %s14, 0
      %p35 = por %p33, %p34
      %p36 = scmp.ne.s32.totalorder %s22, %s23
      %p37 = scmp.eq.s32.totalorder %s15, 1
      %p38 = por %p36, %p37
      %p40 = scmp.ne.s32.totalorder %s23, %s39
      %p41 = scmp.eq.s32.totalorder %s15, 0
      %p42 = por %p40, %p41
      %s44 = sadd.s32 %s43, 1
      %p47 = scmp.eq.s32.totalorder %s9, 1
      %p48 = scmp.ne.s32.totalorder %s43, %s45
      %p49 = scmp.eq.s32.totalorder %s9, 0
      %p50 = por %p48, %p49
      %p51 = scmp.ne.s32.totalorder %s43, %s45
      %p52 = scmp.eq.s32.totalorder %s14, 1
      %p53 = por %p51, %p52
      %p54 = scmp.ne.s32.totalorder %s45, %s46
      %p55 = scmp.eq.s32.totalorder %s14, 0
      %p56 = por %p54, %p55
      %p57 = scmp.ne.s32.totalorder %s45, %s46
      %p58 = scmp.eq.s32.totalorder %s15, 1
      %p59 = por %p57, %p58
      %p61 = scmp.ne.s32.totalorder %s46, %s60
      %p62 = scmp.eq.s32.totalorder %s15, 0
      %p63 = por %p61, %p62
      %s64 = ssub.s32 %s9, %s16
      %p65 = scmp.eq.s32.totalorder %s64, 0
      %s67 = sadd.s32 %s66, 1
      %s68 = scalar_select %p65, %s66, %s67
      %p71 = pneg %p65
      %p72 = scmp.eq.s32.totalorder %s9, 1
      %p73 = por %p71, %p72
      %p74 = scmp.ne.s32.totalorder %s66, %s69
      %p75 = scmp.eq.s32.totalorder %s9, 0
      %p76 = por %p74, %p75
      %p77 = scmp.ne.s32.totalorder %s66, %s69
      %p78 = scmp.eq.s32.totalorder %s14, 1
      %p79 = por %p77, %p78
      %p80 = scmp.ne.s32.totalorder %s69, %s70
      %p81 = scmp.eq.s32.totalorder %s14, 0
      %p82 = por %p80, %p81
      %p83 = scmp.ne.s32.totalorder %s69, %s70
      %p84 = scmp.eq.s32.totalorder %s15, 1
      %p85 = por %p83, %p84
      %p87 = scmp.ne.s32.totalorder %s70, %s86
      %p88 = scmp.eq.s32.totalorder %s15, 0
      %p89 = por %p87, %p88
      %p90 = scmp.le.s32.totalorder 1, %s9
      %p91 = scmp.lt.s32.totalorder %s9, 3
      %p92 = pnand %p90, %p91
      %p93 = pneg %p92
      // Predicated region
      $region9: #{_gcn_forward_core.6} parent=5 // pred_check
        _
      $region10: #{_gcn_forward_core.6} parent=5 // pred_check_branch
        %95 = sbr.rel (%p92) target = $region12
      $region11: #{_gcn_forward_core.6} parent=5 // pred_region
        %s96 = ssub.s32 %s9, 1
        // Predicated region
        $region13: #{_gcn_forward_core.6} parent=11 // pred_check
          %p97 = pneg %p56
        $region14: #{_gcn_forward_core.6} parent=11 // pred_check_branch
          %99 = sbr.rel (%p97) target = $region16
        $region15: #{_gcn_forward_core.6} parent=11 // pred_region
          %101 = vsyncadd [#allocation3], 0
          %s102 = sshll.u32 %s1, 4
          %s103 = int_to_ptr.hbm [resolvable:$true] %s102
          %s104 = sshll.u32 [#allocation2], 4
          %s105 = int_to_ptr.vmem [resolvable:$true] %s104
          %110 = dma.hbm_to_vmem [thread:$0]  %s103, 2048, %s105, [#allocation3], 128, 128, 8
        $region16: #{_gcn_forward_core.6} parent=11 // pred_fallthru
          _
      $region12: #{_gcn_forward_core.6} parent=5 // pred_fallthru
        _
      %p111 = scmp.lt.s32.totalorder %s9, 2
      // Predicated region
      $region17: #{_gcn_forward_core.6} parent=5 // pred_check
        %p112 = pneg %p111
      $region18: #{_gcn_forward_core.6} parent=5 // pred_check_branch
        %114 = sbr.rel (%p112) target = $region20
      $region19: #{_gcn_forward_core.6} parent=5 // pred_region
        // Predicated region
        $region21: #{_gcn_forward_core.6} parent=19 // pred_check
          %p115 = pneg %p29
        $region22: #{_gcn_forward_core.6} parent=19 // pred_check_branch
          %117 = sbr.rel (%p115) target = $region24
        $region23: #{_gcn_forward_core.6} parent=19 // pred_region
          %s118 = smul.u32 16, %s9
          %p119 = scmp.lt.s32.totalorder %s118, 31
          %s120 = scalar_select %p119, %s118, 31
          %s121 = smul.addr %s120, 8
          %s122 = scalar_lea.vmem %s0, %s121
          %s123 = smul.u32 16, %s9
        $region24: #{_gcn_forward_core.6} parent=19 // pred_fallthru
          _
      $region20: #{_gcn_forward_core.6} parent=5 // pred_fallthru
        _
      %p124 = scmp.le.s32.totalorder 1, %s9
      %p125 = scmp.lt.s32.totalorder %s9, 3
      %p126 = pnand %p124, %p125
      %p127 = pneg %p126
      // Predicated region
      $region25: #{_gcn_forward_core.6} parent=5 // pred_check
        _
      $region26: #{_gcn_forward_core.6} parent=5 // pred_check_branch
        %129 = sbr.rel (%p126) target = $region28
      $region27: #{_gcn_forward_core.6} parent=5 // pred_region
        %s130 = ssub.s32 %s9, 1
        // Predicated region
        $region29: #{_gcn_forward_core.6} parent=27 // pred_check
          %p131 = pneg %p56
        $region30: #{_gcn_forward_core.6} parent=27 // pred_check_branch
          %133 = sbr.rel (%p131) target = $region32
        $region31: #{_gcn_forward_core.6} parent=27 // pred_region
          %135 = dma.done [#allocation3], 2048
        $region32: #{_gcn_forward_core.6} parent=27 // pred_fallthru
          _
        %s136 = smul.u32 16, %s14
        %p137 = scmp.lt.s32.totalorder %s136, 31
        %s138 = scalar_select %p137, %s136, 31
        %s139 = smul.addr %s138, 8
        %s140 = scalar_lea.vmem %s0, %s139
        %p141 = pneg %p35
        %p142 = pneg %p32
        %p143 = pneg %p56
        %p144 = pneg %p53
        %p145 = pneg %p82
        %p146 = pneg %p79
        %s147 = smul.u32 16, %s14
        %p148 = scmp.lt.s32.totalorder %s147, 31
        %s149 = scalar_select %p148, %s147, 31
        %s150 = smul.addr %s149, 8
        %s151 = scalar_lea.vmem %s2, %s150
        %s152 = smul.u32 16, %s14
        %p153 = scmp.lt.s32.totalorder %s152, 31
        %s154 = scalar_select %p153, %s152, 31
        %s155 = smul.addr %s154, 8
        %s156 = scalar_lea.vmem %s0, %s155
        %s157 = smul.u32 16, %s14
        %s158 = smul.u32 16, %s14
        %p159 = scmp.lt.s32.totalorder %s158, 31
        %s160 = scalar_select %p159, %s158, 31
        %s161 = smul.addr %s160, 8
        %s162 = scalar_lea.vmem %s2, %s161
        %s163 = smul.u32 16, %s14
        %v164 = vld [vmem:[%s156] sm:$0xff]
        %v165 = vld [vmem:[%s156 + $0x8] sm:$0xff]
        %v166 = vld [vmem:[%s156 + $0x10] sm:$0xff]
        %v167 = vld [vmem:[%s156 + $0x18] sm:$0xff]
        %v168 = vld [vmem:[%s156 + $0x20] sm:$0xff]
        %v169 = vld [vmem:[%s156 + $0x28] sm:$0xff]
        %v170 = vld [vmem:[%s156 + $0x30] sm:$0xff]
        %v171 = vld [vmem:[%s156 + $0x38] sm:$0xff]
        %v172 = vld [vmem:[%s156 + $0x40] sm:$0xff]
        %v173 = vld [vmem:[%s156 + $0x48] sm:$0xff]
        %v174 = vld [vmem:[%s156 + $0x50] sm:$0xff]
        %v175 = vld [vmem:[%s156 + $0x58] sm:$0xff]
        %v176 = vld [vmem:[%s156 + $0x60] sm:$0xff]
        %v177 = vld [vmem:[%s156 + $0x68] sm:$0xff]
        %v178 = vld [vmem:[%s156 + $0x70] sm:$0xff]
        %v179 = vld [vmem:[%s156 + $0x78] sm:$0xff]
        %v180 = vld [vmem:[#allocation2] sm:$0xff]
        %v181 = vld [vmem:[#allocation2 + $0x8] sm:$0xff]
        %v182 = vld [vmem:[#allocation2 + $0x10] sm:$0xff]
        %v183 = vld [vmem:[#allocation2 + $0x18] sm:$0xff]
        %v184 = vld [vmem:[#allocation2 + $0x20] sm:$0xff]
        %v185 = vld [vmem:[#allocation2 + $0x28] sm:$0xff]
        %v186 = vld [vmem:[#allocation2 + $0x30] sm:$0xff]
        %v187 = vld [vmem:[#allocation2 + $0x38] sm:$0xff]
        %v188 = vld [vmem:[#allocation2 + $0x40] sm:$0xff]
        %v189 = vld [vmem:[#allocation2 + $0x48] sm:$0xff]
        %v190 = vld [vmem:[#allocation2 + $0x50] sm:$0xff]
        %v191 = vld [vmem:[#allocation2 + $0x58] sm:$0xff]
        %v192 = vld [vmem:[#allocation2 + $0x60] sm:$0xff]
        %v193 = vld [vmem:[#allocation2 + $0x68] sm:$0xff]
        %v194 = vld [vmem:[#allocation2 + $0x70] sm:$0xff]
        %v195 = vld [vmem:[#allocation2 + $0x78] sm:$0xff]
        %196 = vmatpush.msra.mxu0 %v195
        %197 = vmatpush.msra.mxu0 %v194
        %198 = vmatpush.msra.mxu0 %v193
        %199 = vmatpush.msra.mxu0 %v192
        %200 = vmatpush.msra.mxu0 %v191
        %201 = vmatpush.msra.mxu0 %v190
        %202 = vmatpush.msra.mxu0 %v189
        %203 = vmatpush.msra.mxu0 %v188
        %204 = vmatpush.msra.mxu0 %v187
        %205 = vmatpush.msra.mxu0 %v186
        %206 = vmatpush.msra.mxu0 %v185
        %207 = vmatpush.msra.mxu0 %v184
        %208 = vmatpush.msra.mxu0 %v183
        %209 = vmatpush.msra.mxu0 %v182
        %210 = vmatpush.msra.mxu0 %v181
        %211 = vmatpush.msra.mxu0 %v180
        %212 = vmatmul.f32.gmra.mxu0 %v164
        %v213 = vpop.f32.mrf.mxu0
        %v214 = vadd.f32 0.0, %v213
        %215 = vmatmul.f32.gmra.mxu0 %v165
        %v216 = vpop.f32.mrf.mxu0
        %v217 = vadd.f32 0.0, %v216
        %218 = vmatmul.f32.gmra.mxu0 %v166
        %v219 = vpop.f32.mrf.mxu0
        %v220 = vadd.f32 0.0, %v219
        %221 = vmatmul.f32.gmra.mxu0 %v167
        %v222 = vpop.f32.mrf.mxu0
        %v223 = vadd.f32 0.0, %v222
        %224 = vmatmul.f32.gmra.mxu0 %v168
        %v225 = vpop.f32.mrf.mxu0
        %v226 = vadd.f32 0.0, %v225
        %227 = vmatmul.f32.gmra.mxu0 %v169
        %v228 = vpop.f32.mrf.mxu0
        %v229 = vadd.f32 0.0, %v228
        %230 = vmatmul.f32.gmra.mxu0 %v170
        %v231 = vpop.f32.mrf.mxu0
        %v232 = vadd.f32 0.0, %v231
        %233 = vmatmul.f32.gmra.mxu0 %v171
        %v234 = vpop.f32.mrf.mxu0
        %v235 = vadd.f32 0.0, %v234
        %236 = vmatmul.f32.gmra.mxu0 %v172
        %v237 = vpop.f32.mrf.mxu0
        %v238 = vadd.f32 0.0, %v237
        %239 = vmatmul.f32.gmra.mxu0 %v173
        %v240 = vpop.f32.mrf.mxu0
        %v241 = vadd.f32 0.0, %v240
        %242 = vmatmul.f32.gmra.mxu0 %v174
        %v243 = vpop.f32.mrf.mxu0
        %v244 = vadd.f32 0.0, %v243
        %245 = vmatmul.f32.gmra.mxu0 %v175
        %v246 = vpop.f32.mrf.mxu0
        %v247 = vadd.f32 0.0, %v246
        %248 = vmatmul.f32.gmra.mxu0 %v176
        %v249 = vpop.f32.mrf.mxu0
        %v250 = vadd.f32 0.0, %v249
        %251 = vmatmul.f32.gmra.mxu0 %v177
        %v252 = vpop.f32.mrf.mxu0
        %v253 = vadd.f32 0.0, %v252
        %254 = vmatmul.f32.gmra.mxu0 %v178
        %v255 = vpop.f32.mrf.mxu0
        %v256 = vadd.f32 0.0, %v255
        %257 = vmatmul.f32.gmra.mxu0 %v179
        %v258 = vpop.f32.mrf.mxu0
        %v259 = vadd.f32 0.0, %v258
        %260 = vdwg.mxu0
        %261 = vst [vmem:[%s162] sm:$0xff] %v214
        %262 = vst [vmem:[%s162 + $0x8] sm:$0xff] %v217
        %263 = vst [vmem:[%s162 + $0x10] sm:$0xff] %v220
        %264 = vst [vmem:[%s162 + $0x18] sm:$0xff] %v223
        %265 = vst [vmem:[%s162 + $0x20] sm:$0xff] %v226
        %266 = vst [vmem:[%s162 + $0x28] sm:$0xff] %v229
        %267 = vst [vmem:[%s162 + $0x30] sm:$0xff] %v232
        %268 = vst [vmem:[%s162 + $0x38] sm:$0xff] %v235
        %269 = vst [vmem:[%s162 + $0x40] sm:$0xff] %v238
        %270 = vst [vmem:[%s162 + $0x48] sm:$0xff] %v241
        %271 = vst [vmem:[%s162 + $0x50] sm:$0xff] %v244
        %272 = vst [vmem:[%s162 + $0x58] sm:$0xff] %v247
        %273 = vst [vmem:[%s162 + $0x60] sm:$0xff] %v250
        %274 = vst [vmem:[%s162 + $0x68] sm:$0xff] %v253
        %275 = vst [vmem:[%s162 + $0x70] sm:$0xff] %v256
        %276 = vst [vmem:[%s162 + $0x78] sm:$0xff] %v259
        %s277 = smul.u32 16, %s14
        %p278 = scmp.lt.s32.totalorder %s277, 31
        %s279 = scalar_select %p278, %s277, 31
        %s280 = smul.addr %s279, 8
        %s281 = scalar_lea.vmem %s2, %s280
        // Predicated region
        $region33: #{_gcn_forward_core.6} parent=27 // pred_check
          %p282 = pneg %p79
        $region34: #{_gcn_forward_core.6} parent=27 // pred_check_branch
          %284 = sbr.rel (%p282) target = $region36
        $region35: #{_gcn_forward_core.6} parent=27 // pred_region
          %s285 = smul.u32 16, %s14
        $region36: #{_gcn_forward_core.6} parent=27 // pred_fallthru
          _
      $region28: #{_gcn_forward_core.6} parent=5 // pred_fallthru
        _
      %p286 = scmp.le.s32.totalorder 2, %s9
      // Predicated region
      $region37: #{_gcn_forward_core.6} parent=5 // pred_check
        %p287 = pneg %p286
      $region38: #{_gcn_forward_core.6} parent=5 // pred_check_branch
        %289 = sbr.rel (%p287) target = $region40
      $region39: #{_gcn_forward_core.6} parent=5 // pred_region
        %s290 = ssub.s32 %s9, 2
        // Predicated region
        $region41: #{_gcn_forward_core.6} parent=39 // pred_check
          %p291 = pneg %p85
        $region42: #{_gcn_forward_core.6} parent=39 // pred_check_branch
          %293 = sbr.rel (%p291) target = $region44
        $region43: #{_gcn_forward_core.6} parent=39 // pred_region
          %s294 = smul.u32 16, %s15
          %p295 = scmp.lt.s32.totalorder %s294, 31
          %s296 = scalar_select %p295, %s294, 31
          %s297 = smul.addr %s296, 8
          %s298 = scalar_lea.vmem %s2, %s297
        $region44: #{_gcn_forward_core.6} parent=39 // pred_fallthru
          _
      $region40: #{_gcn_forward_core.6} parent=5 // pred_fallthru
        _
    $region6: #{_gcn_forward_core.6} parent=1 // loop_footer
      %s13 = sadd.s32 1, %s9
    $region7: #{_gcn_forward_core.6} parent=1 // loop_footer_branch
      %8 = sbr.rel target = $region3
    $region8: #{_gcn_forward_core.6} parent=1 // loop_exit
      _
    %299 = vsyncpa [#allocation3], 1
    %s300 = scalar_lea.sflag [#allocation3], 1
    %301 = vsyncpa %s300, 1

// kernel: _gcn_forward_core.8
$region0: #{_gcn_forward_core.8}
  #allocation0 [shape = 'u32[]', space=smem, size = 0x4, offset = 0x4, fixed_abs, tag = 'smem constant byte address 0x4 - core index']
  #allocation1 [shape = 'u32[72,128]{1,0:T(1,128)}', space=vmem, size = 0x9000, scoped, tag = 'internal scratch']
  %s0 = inlined_call_operand.vmem [shape: f32[256,128], index: 0, kind: input, shape index: {}]
  %s1 = inlined_call_operand.vmem [shape: f32[128,128], index: 1, kind: input, shape index: {}]
  %s2 = inlined_call_operand.vmem [shape: f32[256,128], index: 2, kind: output, shape index: {}]
  %s3 = sld [smem:[#allocation0]]
  $region41: #{_gcn_forward_core.8} parent=0
    _
  %s5 = ssub.s32 1, %s3
  %s6 = scalar_select 0, %s5, %s3
  loop: start=0, step=1, limit=4
  $region2: #{_gcn_forward_core.8} parent=0 // loop_pre_header
    _
  $region3: #{_gcn_forward_core.8} parent=0 // loop_header
    %s8 = sphi 0, %s12
    %p9 = scmp.ge.s32.totalorder %s8, 4
    %s18 = sphi 0, %s20
    %s21 = sphi 0, %s18
    %s22 = sphi 0, %s21
    %s38 = sphi 0, %s22
    %s42 = sphi 0, %s42
    %s44 = sphi 0, %s42
    %s45 = sphi 0, %s44
    %s59 = sphi 0, %s45
    %s65 = sphi 0, %s67
    %s68 = sphi 0, %s65
    %s69 = sphi 0, %s68
    %s85 = sphi 0, %s69
  $region4: #{_gcn_forward_core.8} parent=0 // loop_header_branch
    %11 = sbr.rel (%p9) target = $region8
  $region5: #{_gcn_forward_core.8} parent=0 // loop_body
    %s13 = ssub.s32 %s8, 1
    %s14 = ssub.s32 %s8, 2
    %s15 = sadd.s32 %s8, 1
    %s16 = ssub.s32 %s8, %s15
    %p17 = scmp.eq.s32.totalorder %s16, 0
    %s19 = sadd.s32 %s18, 1
    %s20 = scalar_select %p17, %s18, %s19
    %p23 = pneg %p17
    %p24 = scmp.eq.s32.totalorder %s8, 1
    %p25 = por %p23, %p24
    %p26 = scmp.ne.s32.totalorder %s18, %s21
    %p27 = scmp.eq.s32.totalorder %s8, 0
    %p28 = por %p26, %p27
    %p29 = scmp.ne.s32.totalorder %s18, %s21
    %p30 = scmp.eq.s32.totalorder %s13, 1
    %p31 = por %p29, %p30
    %p32 = scmp.ne.s32.totalorder %s21, %s22
    %p33 = scmp.eq.s32.totalorder %s13, 0
    %p34 = por %p32, %p33
    %p35 = scmp.ne.s32.totalorder %s21, %s22
    %p36 = scmp.eq.s32.totalorder %s14, 1
    %p37 = por %p35, %p36
    %p39 = scmp.ne.s32.totalorder %s22, %s38
    %p40 = scmp.eq.s32.totalorder %s14, 0
    %p41 = por %p39, %p40
    %s43 = sadd.s32 %s42, 1
    %p46 = scmp.eq.s32.totalorder %s8, 1
    %p47 = scmp.ne.s32.totalorder %s42, %s44
    %p48 = scmp.eq.s32.totalorder %s8, 0
    %p49 = por %p47, %p48
    %p50 = scmp.ne.s32.totalorder %s42, %s44
    %p51 = scmp.eq.s32.totalorder %s13, 1
    %p52 = por %p50, %p51
    %p53 = scmp.ne.s32.totalorder %s44, %s45
    %p54 = scmp.eq.s32.totalorder %s13, 0
    %p55 = por %p53, %p54
    %p56 = scmp.ne.s32.totalorder %s44, %s45
    %p57 = scmp.eq.s32.totalorder %s14, 1
    %p58 = por %p56, %p57
    %p60 = scmp.ne.s32.totalorder %s45, %s59
    %p61 = scmp.eq.s32.totalorder %s14, 0
    %p62 = por %p60, %p61
    %s63 = ssub.s32 %s8, %s15
    %p64 = scmp.eq.s32.totalorder %s63, 0
    %s66 = sadd.s32 %s65, 1
    %s67 = scalar_select %p64, %s65, %s66
    %p70 = pneg %p64
    %p71 = scmp.eq.s32.totalorder %s8, 1
    %p72 = por %p70, %p71
    %p73 = scmp.ne.s32.totalorder %s65, %s68
    %p74 = scmp.eq.s32.totalorder %s8, 0
    %p75 = por %p73, %p74
    %p76 = scmp.ne.s32.totalorder %s65, %s68
    %p77 = scmp.eq.s32.totalorder %s13, 1
    %p78 = por %p76, %p77
    %p79 = scmp.ne.s32.totalorder %s68, %s69
    %p80 = scmp.eq.s32.totalorder %s13, 0
    %p81 = por %p79, %p80
    %p82 = scmp.ne.s32.totalorder %s68, %s69
    %p83 = scmp.eq.s32.totalorder %s14, 1
    %p84 = por %p82, %p83
    %p86 = scmp.ne.s32.totalorder %s69, %s85
    %p87 = scmp.eq.s32.totalorder %s14, 0
    %p88 = por %p86, %p87
    %p89 = scmp.le.s32.totalorder 1, %s8
    %p90 = scmp.lt.s32.totalorder %s8, 3
    %p91 = pnand %p89, %p90
    %p92 = pneg %p91
    // Predicated region
    $region9: #{_gcn_forward_core.8} parent=5 // pred_check
      _
    $region10: #{_gcn_forward_core.8} parent=5 // pred_check_branch
      %94 = sbr.rel (%p91) target = $region12
    $region11: #{_gcn_forward_core.8} parent=5 // pred_region
      %s95 = ssub.s32 %s8, 1
      // Predicated region
      $region13: #{_gcn_forward_core.8} parent=11 // pred_check
        %p96 = pneg %p55
      $region14: #{_gcn_forward_core.8} parent=11 // pred_check_branch
        %98 = sbr.rel (%p96) target = $region16
      $region15: #{_gcn_forward_core.8} parent=11 // pred_region
        _
      $region16: #{_gcn_forward_core.8} parent=11 // pred_fallthru
        _
    $region12: #{_gcn_forward_core.8} parent=5 // pred_fallthru
      _
    %p99 = scmp.lt.s32.totalorder %s8, 2
    // Predicated region
    $region17: #{_gcn_forward_core.8} parent=5 // pred_check
      %p100 = pneg %p99
    $region18: #{_gcn_forward_core.8} parent=5 // pred_check_branch
      %102 = sbr.rel (%p100) target = $region20
    $region19: #{_gcn_forward_core.8} parent=5 // pred_region
      // Predicated region
      $region21: #{_gcn_forward_core.8} parent=19 // pred_check
        %p103 = pneg %p28
      $region22: #{_gcn_forward_core.8} parent=19 // pred_check_branch
        %105 = sbr.rel (%p103) target = $region24
      $region23: #{_gcn_forward_core.8} parent=19 // pred_region
        %s106 = smul.u32 16, %s8
        %p107 = scmp.lt.s32.totalorder %s106, 31
        %s108 = scalar_select %p107, %s106, 31
        %s109 = smul.addr %s108, 8
        %s110 = scalar_lea.vmem %s0, %s109
        %s111 = smul.u32 16, %s8
      $region24: #{_gcn_forward_core.8} parent=19 // pred_fallthru
        _
    $region20: #{_gcn_forward_core.8} parent=5 // pred_fallthru
      _
    %p112 = scmp.le.s32.totalorder 1, %s8
    %p113 = scmp.lt.s32.totalorder %s8, 3
    %p114 = pnand %p112, %p113
    %p115 = pneg %p114
    // Predicated region
    $region25: #{_gcn_forward_core.8} parent=5 // pred_check
      _
    $region26: #{_gcn_forward_core.8} parent=5 // pred_check_branch
      %117 = sbr.rel (%p114) target = $region28
    $region27: #{_gcn_forward_core.8} parent=5 // pred_region
      %s118 = ssub.s32 %s8, 1
      %s119 = smul.u32 16, %s13
      %p120 = scmp.lt.s32.totalorder %s119, 31
      %s121 = scalar_select %p120, %s119, 31
      %s122 = smul.addr %s121, 8
      %s123 = scalar_lea.vmem %s0, %s122
      %p124 = pneg %p34
      %p125 = pneg %p31
      %p126 = pneg %p55
      %p127 = pneg %p52
      %p128 = pneg %p81
      %p129 = pneg %p78
      %s130 = smul.u32 16, %s13
      %p131 = scmp.lt.s32.totalorder %s130, 31
      %s132 = scalar_select %p131, %s130, 31
      %s133 = smul.addr %s132, 8
      %s134 = scalar_lea.vmem %s2, %s133
      %s135 = smul.u32 16, %s13
      %p136 = scmp.lt.s32.totalorder %s135, 31
      %s137 = scalar_select %p136, %s135, 31
      %s138 = smul.addr %s137, 8
      %s139 = scalar_lea.vmem %s0, %s138
      %s140 = smul.u32 16, %s13
      %s141 = smul.u32 16, %s13
      %p142 = scmp.lt.s32.totalorder %s141, 31
      %s143 = scalar_select %p142, %s141, 31
      %s144 = smul.addr %s143, 8
      %s145 = scalar_lea.vmem %s2, %s144
      %s146 = smul.u32 16, %s13
      %v147 = vld [vmem:[%s139] sm:$0xff]
      %v148 = vld [vmem:[%s139 + $0x8] sm:$0xff]
      %v149 = vld [vmem:[%s139 + $0x10] sm:$0xff]
      %v150 = vld [vmem:[%s139 + $0x18] sm:$0xff]
      %v151 = vld [vmem:[%s139 + $0x20] sm:$0xff]
      %v152 = vld [vmem:[%s139 + $0x28] sm:$0xff]
      %v153 = vld [vmem:[%s139 + $0x30] sm:$0xff]
      %v154 = vld [vmem:[%s139 + $0x38] sm:$0xff]
      %v155 = vld [vmem:[%s139 + $0x40] sm:$0xff]
      %v156 = vld [vmem:[%s139 + $0x48] sm:$0xff]
      %v157 = vld [vmem:[%s139 + $0x50] sm:$0xff]
      %v158 = vld [vmem:[%s139 + $0x58] sm:$0xff]
      %v159 = vld [vmem:[%s139 + $0x60] sm:$0xff]
      %v160 = vld [vmem:[%s139 + $0x68] sm:$0xff]
      %v161 = vld [vmem:[%s139 + $0x70] sm:$0xff]
      %v162 = vld [vmem:[%s139 + $0x78] sm:$0xff]
      %v163 = vld [vmem:[%s1] sm:$0xff]
      %v164 = vld [vmem:[%s1 + $0x8] sm:$0xff]
      %v165 = vld [vmem:[%s1 + $0x10] sm:$0xff]
      %v166 = vld [vmem:[%s1 + $0x18] sm:$0xff]
      %v167 = vld [vmem:[%s1 + $0x20] sm:$0xff]
      %v168 = vld [vmem:[%s1 + $0x28] sm:$0xff]
      %v169 = vld [vmem:[%s1 + $0x30] sm:$0xff]
      %v170 = vld [vmem:[%s1 + $0x38] sm:$0xff]
      %v171 = vld [vmem:[%s1 + $0x40] sm:$0xff]
      %v172 = vld [vmem:[%s1 + $0x48] sm:$0xff]
      %v173 = vld [vmem:[%s1 + $0x50] sm:$0xff]
      %v174 = vld [vmem:[%s1 + $0x58] sm:$0xff]
      %v175 = vld [vmem:[%s1 + $0x60] sm:$0xff]
      %v176 = vld [vmem:[%s1 + $0x68] sm:$0xff]
      %v177 = vld [vmem:[%s1 + $0x70] sm:$0xff]
      %v178 = vld [vmem:[%s1 + $0x78] sm:$0xff]
      %179 = vmatpush.msra.mxu0 %v178
      %180 = vmatpush.msra.mxu0 %v177
      %181 = vmatpush.msra.mxu0 %v176
      %182 = vmatpush.msra.mxu0 %v175
      %183 = vmatpush.msra.mxu0 %v174
      %184 = vmatpush.msra.mxu0 %v173
      %185 = vmatpush.msra.mxu0 %v172
      %186 = vmatpush.msra.mxu0 %v171
      %187 = vmatpush.msra.mxu0 %v170
      %188 = vmatpush.msra.mxu0 %v169
      %189 = vmatpush.msra.mxu0 %v168
      %190 = vmatpush.msra.mxu0 %v167
      %191 = vmatpush.msra.mxu0 %v166
      %192 = vmatpush.msra.mxu0 %v165
      %193 = vmatpush.msra.mxu0 %v164
      %194 = vmatpush.msra.mxu0 %v163
      %195 = vmatmul.f32.gmra.mxu0 %v147
      %v196 = vpop.f32.mrf.mxu0
      %v197 = vadd.f32 0.0, %v196
      %198 = vmatmul.f32.gmra.mxu0 %v148
      %v199 = vpop.f32.mrf.mxu0
      %v200 = vadd.f32 0.0, %v199
      %201 = vmatmul.f32.gmra.mxu0 %v149
      %v202 = vpop.f32.mrf.mxu0
      %v203 = vadd.f32 0.0, %v202
      %204 = vmatmul.f32.gmra.mxu0 %v150
      %v205 = vpop.f32.mrf.mxu0
      %v206 = vadd.f32 0.0, %v205
      %207 = vmatmul.f32.gmra.mxu0 %v151
      %v208 = vpop.f32.mrf.mxu0
      %v209 = vadd.f32 0.0, %v208
      %210 = vmatmul.f32.gmra.mxu0 %v152
      %v211 = vpop.f32.mrf.mxu0
      %v212 = vadd.f32 0.0, %v211
      %213 = vmatmul.f32.gmra.mxu0 %v153
      %v214 = vpop.f32.mrf.mxu0
      %v215 = vadd.f32 0.0, %v214
      %216 = vmatmul.f32.gmra.mxu0 %v154
      %v217 = vpop.f32.mrf.mxu0
      %v218 = vadd.f32 0.0, %v217
      %219 = vmatmul.f32.gmra.mxu0 %v155
      %v220 = vpop.f32.mrf.mxu0
      %v221 = vadd.f32 0.0, %v220
      %222 = vmatmul.f32.gmra.mxu0 %v156
      %v223 = vpop.f32.mrf.mxu0
      %v224 = vadd.f32 0.0, %v223
      %225 = vmatmul.f32.gmra.mxu0 %v157
      %v226 = vpop.f32.mrf.mxu0
      %v227 = vadd.f32 0.0, %v226
      %228 = vmatmul.f32.gmra.mxu0 %v158
      %v229 = vpop.f32.mrf.mxu0
      %v230 = vadd.f32 0.0, %v229
      %231 = vmatmul.f32.gmra.mxu0 %v159
      %v232 = vpop.f32.mrf.mxu0
      %v233 = vadd.f32 0.0, %v232
      %234 = vmatmul.f32.gmra.mxu0 %v160
      %v235 = vpop.f32.mrf.mxu0
      %v236 = vadd.f32 0.0, %v235
      %237 = vmatmul.f32.gmra.mxu0 %v161
      %v238 = vpop.f32.mrf.mxu0
      %v239 = vadd.f32 0.0, %v238
      %240 = vmatmul.f32.gmra.mxu0 %v162
      %v241 = vpop.f32.mrf.mxu0
      %v242 = vadd.f32 0.0, %v241
      %243 = vdwg.mxu0
      %244 = vst [vmem:[%s145] sm:$0xff] %v197
      %245 = vst [vmem:[%s145 + $0x8] sm:$0xff] %v200
      %246 = vst [vmem:[%s145 + $0x10] sm:$0xff] %v203
      %247 = vst [vmem:[%s145 + $0x18] sm:$0xff] %v206
      %248 = vst [vmem:[%s145 + $0x20] sm:$0xff] %v209
      %249 = vst [vmem:[%s145 + $0x28] sm:$0xff] %v212
      %250 = vst [vmem:[%s145 + $0x30] sm:$0xff] %v215
      %251 = vst [vmem:[%s145 + $0x38] sm:$0xff] %v218
      %252 = vst [vmem:[%s145 + $0x40] sm:$0xff] %v221
      %253 = vst [vmem:[%s145 + $0x48] sm:$0xff] %v224
      %254 = vst [vmem:[%s145 + $0x50] sm:$0xff] %v227
      %255 = vst [vmem:[%s145 + $0x58] sm:$0xff] %v230
      %256 = vst [vmem:[%s145 + $0x60] sm:$0xff] %v233
      %257 = vst [vmem:[%s145 + $0x68] sm:$0xff] %v236
      %258 = vst [vmem:[%s145 + $0x70] sm:$0xff] %v239
      %259 = vst [vmem:[%s145 + $0x78] sm:$0xff] %v242
      %s260 = smul.u32 16, %s13
      %p261 = scmp.lt.s32.totalorder %s260, 31
      %s262 = scalar_select %p261, %s260, 31
      %s263 = smul.addr %s262, 8
      %s264 = scalar_lea.vmem %s2, %s263
      // Predicated region
      $region29: #{_gcn_forward_core.8} parent=27 // pred_check
        %p265 = pneg %p78
      $region30: #{_gcn_forward_core.8} parent=27 // pred_check_branch
        %267 = sbr.rel (%p265) target = $region32
      $region31: #{_gcn_forward_core.8} parent=27 // pred_region
        %s268 = smul.u32 16, %s13
      $region32: #{_gcn_forward_core.8} parent=27 // pred_fallthru
        _
    $region28: #{_gcn_forward_core.8} parent=5 // pred_fallthru
      _
    %p269 = scmp.le.s32.totalorder 2, %s8
    // Predicated region
    $region33: #{_gcn_forward_core.8} parent=5 // pred_check
      %p270 = pneg %p269
    $region34: #{_gcn_forward_core.8} parent=5 // pred_check_branch
      %272 = sbr.rel (%p270) target = $region36
    $region35: #{_gcn_forward_core.8} parent=5 // pred_region
      %s273 = ssub.s32 %s8, 2
      // Predicated region
      $region37: #{_gcn_forward_core.8} parent=35 // pred_check
        %p274 = pneg %p84
      $region38: #{_gcn_forward_core.8} parent=35 // pred_check_branch
        %276 = sbr.rel (%p274) target = $region40
      $region39: #{_gcn_forward_core.8} parent=35 // pred_region
        %s277 = smul.u32 16, %s14
        %p278 = scmp.lt.s32.totalorder %s277, 31
        %s279 = scalar_select %p278, %s277, 31
        %s280 = smul.addr %s279, 8
        %s281 = scalar_lea.vmem %s2, %s280
      $region40: #{_gcn_forward_core.8} parent=35 // pred_fallthru
        _
    $region36: #{_gcn_forward_core.8} parent=5 // pred_fallthru
      _
  $region6: #{_gcn_forward_core.8} parent=0 // loop_footer
    %s12 = sadd.s32 1, %s8
  $region7: #{_gcn_forward_core.8} parent=0 // loop_footer_branch
    %7 = sbr.rel target = $region3
  $region8: #{_gcn_forward_core.8} parent=0 // loop_exit
    _

// kernel: _gcn_forward_core.7
$region0: #{_gcn_forward_core.7}
  #allocation0 [shape = 'u32[]', space=smem, size = 0x4, offset = 0x4, fixed_abs, tag = 'smem constant byte address 0x4 - core index']
  #allocation1 [shape = 'u32[72,128]{1,0:T(1,128)}', space=vmem, size = 0x9000, scoped, tag = 'internal scratch']
  #allocation2 [shape = 'f32[128,128]{1,0:T(8,128)}', space=vmem, size = 0x10000, scoped, tag = 'scratch operand']
  %s0 = inlined_call_operand.vmem [shape: f32[256,256], index: 0, kind: input, shape index: {}]
  %s1 = inlined_call_operand.vmem [shape: f32[256,128], index: 1, kind: input, shape index: {}]
  %s2 = inlined_call_operand.vmem [shape: f32[1,128], index: 2, kind: input, shape index: {}]
  %s3 = inlined_call_operand.vmem [shape: f32[256,128], index: 3, kind: output, shape index: {}]
  %s4 = sld [smem:[#allocation0]]
  $region53: #{_gcn_forward_core.7} parent=0
    _
  %s6 = ssub.s32 1, %s4
  %s7 = scalar_select 0, %s6, %s4
  loop: start=0, step=1, limit=4
  $region2: #{_gcn_forward_core.7} parent=0 // loop_pre_header
    _
  $region3: #{_gcn_forward_core.7} parent=0 // loop_header
    %s9 = sphi 0, %s13
    %p10 = scmp.ge.s32.totalorder %s9, 4
    %s16 = sphi 0, %s28
    %s17 = sphi 0, %s24
    %s18 = sphi 0, %s16
    %s19 = sphi 0, %s17
    %s20 = sphi 0, %s18
    %s21 = sphi 0, %s19
    %s33 = sphi 0, %s35
    %s36 = sphi 0, %s33
    %s37 = sphi 0, %s36
    %s53 = sphi 0, %s37
    %s59 = sphi 0, %s61
    %s62 = sphi 0, %s59
    %s63 = sphi 0, %s62
    %s79 = sphi 0, %s63
    %s83 = sphi 0, %s83
    %s85 = sphi 0, %s83
    %s86 = sphi 0, %s85
    %s100 = sphi 0, %s86
    %s106 = sphi 0, %s108
    %s109 = sphi 0, %s106
    %s110 = sphi 0, %s109
    %s126 = sphi 0, %s110
  $region4: #{_gcn_forward_core.7} parent=0 // loop_header_branch
    %12 = sbr.rel (%p10) target = $region8
  $region5: #{_gcn_forward_core.7} parent=0 // loop_body
    %s14 = ssub.s32 %s9, 1
    %s15 = ssub.s32 %s9, 2
    %s22 = sadd.s32 1, %s17
    %p23 = scmp.ge.s32.totalorder %s22, 1
    %s24 = scalar_select %p23, 0, %s22
    %s25 = sadd.s32 1, %s16
    %s26 = scalar_select %p23, %s25, %s16
    %p27 = scmp.ge.s32.totalorder %s26, 2
    %s28 = scalar_select %p27, 0, %s26
    %s29 = ssub.s32 %s16, %s28
    %s30 = ssub.s32 %s17, %s24
    %s31 = sor.u32 %s29, %s30
    %p32 = scmp.eq.s32.totalorder %s31, 0
    %s34 = sadd.s32 %s33, 1
    %s35 = scalar_select %p32, %s33, %s34
    %p38 = pneg %p32
    %p39 = scmp.eq.s32.totalorder %s9, 1
    %p40 = por %p38, %p39
    %p41 = scmp.ne.s32.totalorder %s33, %s36
    %p42 = scmp.eq.s32.totalorder %s9, 0
    %p43 = por %p41, %p42
    %p44 = scmp.ne.s32.totalorder %s33, %s36
    %p45 = scmp.eq.s32.totalorder %s14, 1
    %p46 = por %p44, %p45
    %p47 = scmp.ne.s32.totalorder %s36, %s37
    %p48 = scmp.eq.s32.totalorder %s14, 0
    %p49 = por %p47, %p48
    %p50 = scmp.ne.s32.totalorder %s36, %s37
    %p51 = scmp.eq.s32.totalorder %s15, 1
    %p52 = por %p50, %p51
    %p54 = scmp.ne.s32.totalorder %s37, %s53
    %p55 = scmp.eq.s32.totalorder %s15, 0
    %p56 = por %p54, %p55
    %s57 = ssub.s32 %s17, %s24
    %p58 = scmp.eq.s32.totalorder %s57, 0
    %s60 = sadd.s32 %s59, 1
    %s61 = scalar_select %p58, %s59, %s60
    %p64 = pneg %p58
    %p65 = scmp.eq.s32.totalorder %s9, 1
    %p66 = por %p64, %p65
    %p67 = scmp.ne.s32.totalorder %s59, %s62
    %p68 = scmp.eq.s32.totalorder %s9, 0
    %p69 = por %p67, %p68
    %p70 = scmp.ne.s32.totalorder %s59, %s62
    %p71 = scmp.eq.s32.totalorder %s14, 1
    %p72 = por %p70, %p71
    %p73 = scmp.ne.s32.totalorder %s62, %s63
    %p74 = scmp.eq.s32.totalorder %s14, 0
    %p75 = por %p73, %p74
    %p76 = scmp.ne.s32.totalorder %s62, %s63
    %p77 = scmp.eq.s32.totalorder %s15, 1
    %p78 = por %p76, %p77
    %p80 = scmp.ne.s32.totalorder %s63, %s79
    %p81 = scmp.eq.s32.totalorder %s15, 0
    %p82 = por %p80, %p81
    %s84 = sadd.s32 %s83, 1
    %p87 = scmp.eq.s32.totalorder %s9, 1
    %p88 = scmp.ne.s32.totalorder %s83, %s85
    %p89 = scmp.eq.s32.totalorder %s9, 0
    %p90 = por %p88, %p89
    %p91 = scmp.ne.s32.totalorder %s83, %s85
    %p92 = scmp.eq.s32.totalorder %s14, 1
    %p93 = por %p91, %p92
    %p94 = scmp.ne.s32.totalorder %s85, %s86
    %p95 = scmp.eq.s32.totalorder %s14, 0
    %p96 = por %p94, %p95
    %p97 = scmp.ne.s32.totalorder %s85, %s86
    %p98 = scmp.eq.s32.totalorder %s15, 1
    %p99 = por %p97, %p98
    %p101 = scmp.ne.s32.totalorder %s86, %s100
    %p102 = scmp.eq.s32.totalorder %s15, 0
    %p103 = por %p101, %p102
    %s104 = ssub.s32 %s16, %s28
    %p105 = scmp.eq.s32.totalorder %s104, 0
    %s107 = sadd.s32 %s106, 1
    %s108 = scalar_select %p105, %s106, %s107
    %p111 = pneg %p105
    %p112 = scmp.eq.s32.totalorder %s9, 1
    %p113 = por %p111, %p112
    %p114 = scmp.ne.s32.totalorder %s106, %s109
    %p115 = scmp.eq.s32.totalorder %s9, 0
    %p116 = por %p114, %p115
    %p117 = scmp.ne.s32.totalorder %s106, %s109
    %p118 = scmp.eq.s32.totalorder %s14, 1
    %p119 = por %p117, %p118
    %p120 = scmp.ne.s32.totalorder %s109, %s110
    %p121 = scmp.eq.s32.totalorder %s14, 0
    %p122 = por %p120, %p121
    %p123 = scmp.ne.s32.totalorder %s109, %s110
    %p124 = scmp.eq.s32.totalorder %s15, 1
    %p125 = por %p123, %p124
    %p127 = scmp.ne.s32.totalorder %s110, %s126
    %p128 = scmp.eq.s32.totalorder %s15, 0
    %p129 = por %p127, %p128
    %p130 = scmp.le.s32.totalorder 1, %s9
    %p131 = scmp.lt.s32.totalorder %s9, 3
    %p132 = pnand %p130, %p131
    %p133 = pneg %p132
    // Predicated region
    $region9: #{_gcn_forward_core.7} parent=5 // pred_check
      _
    $region10: #{_gcn_forward_core.7} parent=5 // pred_check_branch
      %135 = sbr.rel (%p132) target = $region12
    $region11: #{_gcn_forward_core.7} parent=5 // pred_region
      %s136 = ssub.s32 %s9, 1
      // Predicated region
      $region13: #{_gcn_forward_core.7} parent=11 // pred_check
        %p137 = pneg %p75
      $region14: #{_gcn_forward_core.7} parent=11 // pred_check_branch
        %139 = sbr.rel (%p137) target = $region16
      $region15: #{_gcn_forward_core.7} parent=11 // pred_region
        %s140 = smul.u32 32, %s19
        %p141 = scmp.lt.s32.totalorder %s140, 31
        %s142 = scalar_select %p141, %s140, 31
        %s143 = smul.addr %s142, 8
        %s144 = scalar_lea.vmem %s1, %s143
        %s145 = smul.u32 32, %s19
      $region16: #{_gcn_forward_core.7} parent=11 // pred_fallthru
        _
      // Predicated region
      $region17: #{_gcn_forward_core.7} parent=11 // pred_check
        %p146 = pneg %p96
      $region18: #{_gcn_forward_core.7} parent=11 // pred_check_branch
        %148 = sbr.rel (%p146) target = $region20
      $region19: #{_gcn_forward_core.7} parent=11 // pred_region
        _
      $region20: #{_gcn_forward_core.7} parent=11 // pred_fallthru
        _
    $region12: #{_gcn_forward_core.7} parent=5 // pred_fallthru
      _
    %p149 = scmp.lt.s32.totalorder %s9, 2
    // Predicated region
    $region21: #{_gcn_forward_core.7} parent=5 // pred_check
      %p150 = pneg %p149
    $region22: #{_gcn_forward_core.7} parent=5 // pred_check_branch
      %152 = sbr.rel (%p150) target = $region24
    $region23: #{_gcn_forward_core.7} parent=5 // pred_region
      // Predicated region
      $region25: #{_gcn_forward_core.7} parent=23 // pred_check
        %p153 = pneg %p43
      $region26: #{_gcn_forward_core.7} parent=23 // pred_check_branch
        %155 = sbr.rel (%p153) target = $region28
      $region27: #{_gcn_forward_core.7} parent=23 // pred_region
        %s156 = smul.u32 16, %s16
        %s157 = smul.u32 2, %s17
        %p158 = scmp.lt.s32.totalorder %s156, 31
        %s159 = scalar_select %p158, %s156, 31
        %p160 = scmp.lt.s32.totalorder %s157, 1
        %s161 = scalar_select %p160, %s157, 1
        %s162 = smul.addr %s159, 2
        %s163 = sadd.s32 %s161, %s162
        %s164 = smul.addr %s163, 8
        %s165 = scalar_lea.vmem %s0, %s164
        %s166 = smul.u32 16, %s16
        %s167 = smul.u32 2, %s17
      $region28: #{_gcn_forward_core.7} parent=23 // pred_fallthru
        _
    $region24: #{_gcn_forward_core.7} parent=5 // pred_fallthru
      _
    %p168 = scmp.le.s32.totalorder 1, %s9
    %p169 = scmp.lt.s32.totalorder %s9, 3
    %p170 = pnand %p168, %p169
    %p171 = pneg %p170
    // Predicated region
    $region29: #{_gcn_forward_core.7} parent=5 // pred_check
      _
    $region30: #{_gcn_forward_core.7} parent=5 // pred_check_branch
      %173 = sbr.rel (%p170) target = $region32
    $region31: #{_gcn_forward_core.7} parent=5 // pred_region
      %s174 = ssub.s32 %s9, 1
      %s175 = smul.u32 16, %s18
      %s176 = smul.u32 2, %s19
      %p177 = scmp.lt.s32.totalorder %s175, 31
      %s178 = scalar_select %p177, %s175, 31
      %p179 = scmp.lt.s32.totalorder %s176, 1
      %s180 = scalar_select %p179, %s176, 1
      %s181 = smul.addr %s178, 2
      %s182 = sadd.s32 %s180, %s181
      %s183 = smul.addr %s182, 8
      %s184 = scalar_lea.vmem %s0, %s183
      %p185 = pneg %p49
      %p186 = pneg %p46
      %s187 = smul.u32 32, %s19
      %p188 = scmp.lt.s32.totalorder %s187, 31
      %s189 = scalar_select %p188, %s187, 31
      %s190 = smul.addr %s189, 8
      %s191 = scalar_lea.vmem %s1, %s190
      %p192 = pneg %p75
      %p193 = pneg %p72
      %p194 = pneg %p96
      %p195 = pneg %p93
      %p196 = pneg %p122
      %p197 = pneg %p119
      %s198 = smul.u32 16, %s18
      %p199 = scmp.lt.s32.totalorder %s198, 31
      %s200 = scalar_select %p199, %s198, 31
      %s201 = smul.addr %s200, 8
      %s202 = scalar_lea.vmem %s3, %s201
      %s203 = smul.u32 16, %s18
      %s204 = smul.u32 2, %s19
      %p205 = scmp.lt.s32.totalorder %s203, 31
      %s206 = scalar_select %p205, %s203, 31
      %p207 = scmp.lt.s32.totalorder %s204, 1
      %s208 = scalar_select %p207, %s204, 1
      %s209 = smul.addr %s206, 2
      %s210 = sadd.s32 %s208, %s209
      %s211 = smul.addr %s210, 8
      %s212 = scalar_lea.vmem %s0, %s211
      %s213 = smul.u32 16, %s18
      %s214 = smul.u32 2, %s19
      %s215 = smul.u32 32, %s19
      %p216 = scmp.lt.s32.totalorder %s215, 31
      %s217 = scalar_select %p216, %s215, 31
      %s218 = smul.addr %s217, 8
      %s219 = scalar_lea.vmem %s1, %s218
      %s220 = smul.u32 32, %s19
      %s221 = smul.u32 16, %s18
      %p222 = scmp.lt.s32.totalorder %s221, 31
      %s223 = scalar_select %p222, %s221, 31
      %s224 = smul.addr %s223, 8
      %s225 = scalar_lea.vmem %s3, %s224
      %s226 = smul.u32 16, %s18
      %p227 = scmp.eq.s32.totalorder %s19, 0
      // Predicated region
      $region33: #{_gcn_forward_core.7} parent=31 // pred_check
        %p228 = pneg %p227
      $region34: #{_gcn_forward_core.7} parent=31 // pred_check_branch
        %230 = sbr.rel (%p228) target = $region36
      $region35: #{_gcn_forward_core.7} parent=31 // pred_region
        %231 = vst [vmem:[#allocation2] sm:$0xff] 0.0
        %232 = vst [vmem:[#allocation2 + $0x8] sm:$0xff] 0.0
        %233 = vst [vmem:[#allocation2 + $0x10] sm:$0xff] 0.0
        %234 = vst [vmem:[#allocation2 + $0x18] sm:$0xff] 0.0
        %235 = vst [vmem:[#allocation2 + $0x20] sm:$0xff] 0.0
        %236 = vst [vmem:[#allocation2 + $0x28] sm:$0xff] 0.0
        %237 = vst [vmem:[#allocation2 + $0x30] sm:$0xff] 0.0
        %238 = vst [vmem:[#allocation2 + $0x38] sm:$0xff] 0.0
        %239 = vst [vmem:[#allocation2 + $0x40] sm:$0xff] 0.0
        %240 = vst [vmem:[#allocation2 + $0x48] sm:$0xff] 0.0
        %241 = vst [vmem:[#allocation2 + $0x50] sm:$0xff] 0.0
        %242 = vst [vmem:[#allocation2 + $0x58] sm:$0xff] 0.0
        %243 = vst [vmem:[#allocation2 + $0x60] sm:$0xff] 0.0
        %244 = vst [vmem:[#allocation2 + $0x68] sm:$0xff] 0.0
        %245 = vst [vmem:[#allocation2 + $0x70] sm:$0xff] 0.0
        %246 = vst [vmem:[#allocation2 + $0x78] sm:$0xff] 0.0
      $region36: #{_gcn_forward_core.7} parent=31 // pred_fallthru
        _
      %v247 = vld [vmem:[#allocation2] sm:$0xff]
      %v248 = vld [vmem:[#allocation2 + $0x8] sm:$0xff]
      %v249 = vld [vmem:[#allocation2 + $0x10] sm:$0xff]
      %v250 = vld [vmem:[#allocation2 + $0x18] sm:$0xff]
      %v251 = vld [vmem:[#allocation2 + $0x20] sm:$0xff]
      %v252 = vld [vmem:[#allocation2 + $0x28] sm:$0xff]
      %v253 = vld [vmem:[#allocation2 + $0x30] sm:$0xff]
      %v254 = vld [vmem:[#allocation2 + $0x38] sm:$0xff]
      %v255 = vld [vmem:[#allocation2 + $0x40] sm:$0xff]
      %v256 = vld [vmem:[#allocation2 + $0x48] sm:$0xff]
      %v257 = vld [vmem:[#allocation2 + $0x50] sm:$0xff]
      %v258 = vld [vmem:[#allocation2 + $0x58] sm:$0xff]
      %v259 = vld [vmem:[#allocation2 + $0x60] sm:$0xff]
      %v260 = vld [vmem:[#allocation2 + $0x68] sm:$0xff]
      %v261 = vld [vmem:[#allocation2 + $0x70] sm:$0xff]
      %v262 = vld [vmem:[#allocation2 + $0x78] sm:$0xff]
      %v263 = vld [vmem:[%s212] sm:$0xff]
      %v264 = vld [vmem:[%s212 + $0x8] sm:$0xff]
      %v265 = vld [vmem:[%s212 + $0x10] sm:$0xff]
      %v266 = vld [vmem:[%s212 + $0x18] sm:$0xff]
      %v267 = vld [vmem:[%s212 + $0x20] sm:$0xff]
      %v268 = vld [vmem:[%s212 + $0x28] sm:$0xff]
      %v269 = vld [vmem:[%s212 + $0x30] sm:$0xff]
      %v270 = vld [vmem:[%s212 + $0x38] sm:$0xff]
      %v271 = vld [vmem:[%s212 + $0x40] sm:$0xff]
      %v272 = vld [vmem:[%s212 + $0x48] sm:$0xff]
      %v273 = vld [vmem:[%s212 + $0x50] sm:$0xff]
      %v274 = vld [vmem:[%s212 + $0x58] sm:$0xff]
      %v275 = vld [vmem:[%s212 + $0x60] sm:$0xff]
      %v276 = vld [vmem:[%s212 + $0x68] sm:$0xff]
      %v277 = vld [vmem:[%s212 + $0x70] sm:$0xff]
      %v278 = vld [vmem:[%s212 + $0x78] sm:$0xff]
      %v279 = vld [vmem:[%s212 + $0x80] sm:$0xff]
      %v280 = vld [vmem:[%s212 + $0x88] sm:$0xff]
      %v281 = vld [vmem:[%s212 + $0x90] sm:$0xff]
      %v282 = vld [vmem:[%s212 + $0x98] sm:$0xff]
      %v283 = vld [vmem:[%s212 + $0xa0] sm:$0xff]
      %v284 = vld [vmem:[%s212 + $0xa8] sm:$0xff]
      %v285 = vld [vmem:[%s212 + $0xb0] sm:$0xff]
      %v286 = vld [vmem:[%s212 + $0xb8] sm:$0xff]
      %v287 = vld [vmem:[%s212 + $0xc0] sm:$0xff]
      %v288 = vld [vmem:[%s212 + $0xc8] sm:$0xff]
      %v289 = vld [vmem:[%s212 + $0xd0] sm:$0xff]
      %v290 = vld [vmem:[%s212 + $0xd8] sm:$0xff]
      %v291 = vld [vmem:[%s212 + $0xe0] sm:$0xff]
      %v292 = vld [vmem:[%s212 + $0xe8] sm:$0xff]
      %v293 = vld [vmem:[%s212 + $0xf0] sm:$0xff]
      %v294 = vld [vmem:[%s212 + $0xf8] sm:$0xff]
      %v295 = vld [vmem:[%s219] sm:$0xff]
      %v296 = vld [vmem:[%s219 + $0x8] sm:$0xff]
      %v297 = vld [vmem:[%s219 + $0x10] sm:$0xff]
      %v298 = vld [vmem:[%s219 + $0x18] sm:$0xff]
      %v299 = vld [vmem:[%s219 + $0x20] sm:$0xff]
      %v300 = vld [vmem:[%s219 + $0x28] sm:$0xff]
      %v301 = vld [vmem:[%s219 + $0x30] sm:$0xff]
      %v302 = vld [vmem:[%s219 + $0x38] sm:$0xff]
      %v303 = vld [vmem:[%s219 + $0x40] sm:$0xff]
      %v304 = vld [vmem:[%s219 + $0x48] sm:$0xff]
      %v305 = vld [vmem:[%s219 + $0x50] sm:$0xff]
      %v306 = vld [vmem:[%s219 + $0x58] sm:$0xff]
      %v307 = vld [vmem:[%s219 + $0x60] sm:$0xff]
      %v308 = vld [vmem:[%s219 + $0x68] sm:$0xff]
      %v309 = vld [vmem:[%s219 + $0x70] sm:$0xff]
      %v310 = vld [vmem:[%s219 + $0x78] sm:$0xff]
      %v311 = vld [vmem:[%s219 + $0x80] sm:$0xff]
      %v312 = vld [vmem:[%s219 + $0x88] sm:$0xff]
      %v313 = vld [vmem:[%s219 + $0x90] sm:$0xff]
      %v314 = vld [vmem:[%s219 + $0x98] sm:$0xff]
      %v315 = vld [vmem:[%s219 + $0xa0] sm:$0xff]
      %v316 = vld [vmem:[%s219 + $0xa8] sm:$0xff]
      %v317 = vld [vmem:[%s219 + $0xb0] sm:$0xff]
      %v318 = vld [vmem:[%s219 + $0xb8] sm:$0xff]
      %v319 = vld [vmem:[%s219 + $0xc0] sm:$0xff]
      %v320 = vld [vmem:[%s219 + $0xc8] sm:$0xff]
      %v321 = vld [vmem:[%s219 + $0xd0] sm:$0xff]
      %v322 = vld [vmem:[%s219 + $0xd8] sm:$0xff]
      %v323 = vld [vmem:[%s219 + $0xe0] sm:$0xff]
      %v324 = vld [vmem:[%s219 + $0xe8] sm:$0xff]
      %v325 = vld [vmem:[%s219 + $0xf0] sm:$0xff]
      %v326 = vld [vmem:[%s219 + $0xf8] sm:$0xff]
      %327 = vmatpush.msra.mxu0 %v310
      %328 = vmatpush.msra.mxu0 %v309
      %329 = vmatpush.msra.mxu0 %v308
      %330 = vmatpush.msra.mxu0 %v307
      %331 = vmatpush.msra.mxu0 %v306
      %332 = vmatpush.msra.mxu0 %v305
      %333 = vmatpush.msra.mxu0 %v304
      %334 = vmatpush.msra.mxu0 %v303
      %335 = vmatpush.msra.mxu0 %v302
      %336 = vmatpush.msra.mxu0 %v301
      %337 = vmatpush.msra.mxu0 %v300
      %338 = vmatpush.msra.mxu0 %v299
      %339 = vmatpush.msra.mxu0 %v298
      %340 = vmatpush.msra.mxu0 %v297
      %341 = vmatpush.msra.mxu0 %v296
      %342 = vmatpush.msra.mxu0 %v295
      %343 = vmatmul.f32.gmra.mxu0 %v263
      %v344 = vpop.f32.mrf.mxu0
      %v345 = vadd.f32 0.0, %v344
      %346 = vmatmul.f32.gmra.mxu0 %v265
      %v347 = vpop.f32.mrf.mxu0
      %v348 = vadd.f32 0.0, %v347
      %349 = vmatmul.f32.gmra.mxu0 %v267
      %v350 = vpop.f32.mrf.mxu0
      %v351 = vadd.f32 0.0, %v350
      %352 = vmatmul.f32.gmra.mxu0 %v269
      %v353 = vpop.f32.mrf.mxu0
      %v354 = vadd.f32 0.0, %v353
      %355 = vmatmul.f32.gmra.mxu0 %v271
      %v356 = vpop.f32.mrf.mxu0
      %v357 = vadd.f32 0.0, %v356
      %358 = vmatmul.f32.gmra.mxu0 %v273
      %v359 = vpop.f32.mrf.mxu0
      %v360 = vadd.f32 0.0, %v359
      %361 = vmatmul.f32.gmra.mxu0 %v275
      %v362 = vpop.f32.mrf.mxu0
      %v363 = vadd.f32 0.0, %v362
      %364 = vmatmul.f32.gmra.mxu0 %v277
      %v365 = vpop.f32.mrf.mxu0
      %v366 = vadd.f32 0.0, %v365
      %367 = vmatmul.f32.gmra.mxu0 %v279
      %v368 = vpop.f32.mrf.mxu0
      %v369 = vadd.f32 0.0, %v368
      %370 = vmatmul.f32.gmra.mxu0 %v281
      %v371 = vpop.f32.mrf.mxu0
      %v372 = vadd.f32 0.0, %v371
      %373 = vmatmul.f32.gmra.mxu0 %v283
      %v374 = vpop.f32.mrf.mxu0
      %v375 = vadd.f32 0.0, %v374
      %376 = vmatmul.f32.gmra.mxu0 %v285
      %v377 = vpop.f32.mrf.mxu0
      %v378 = vadd.f32 0.0, %v377
      %379 = vmatmul.f32.gmra.mxu0 %v287
      %v380 = vpop.f32.mrf.mxu0
      %v381 = vadd.f32 0.0, %v380
      %382 = vmatmul.f32.gmra.mxu0 %v289
      %v383 = vpop.f32.mrf.mxu0
      %v384 = vadd.f32 0.0, %v383
      %385 = vmatmul.f32.gmra.mxu0 %v291
      %v386 = vpop.f32.mrf.mxu0
      %v387 = vadd.f32 0.0, %v386
      %388 = vmatmul.f32.gmra.mxu0 %v293
      %v389 = vpop.f32.mrf.mxu0
      %v390 = vadd.f32 0.0, %v389
      %391 = vdwg.mxu0
      %392 = vmatpush.msra.mxu0 %v326
      %393 = vmatpush.msra.mxu0 %v325
      %394 = vmatpush.msra.mxu0 %v324
      %395 = vmatpush.msra.mxu0 %v323
      %396 = vmatpush.msra.mxu0 %v322
      %397 = vmatpush.msra.mxu0 %v321
      %398 = vmatpush.msra.mxu0 %v320
      %399 = vmatpush.msra.mxu0 %v319
      %400 = vmatpush.msra.mxu0 %v318
      %401 = vmatpush.msra.mxu0 %v317
      %402 = vmatpush.msra.mxu0 %v316
      %403 = vmatpush.msra.mxu0 %v315
      %404 = vmatpush.msra.mxu0 %v314
      %405 = vmatpush.msra.mxu0 %v313
      %406 = vmatpush.msra.mxu0 %v312
      %407 = vmatpush.msra.mxu0 %v311
      %408 = vmatmul.f32.gmra.mxu0 %v264
      %v409 = vpop.f32.mrf.mxu0
      %v410 = vadd.f32 %v345, %v409
      %411 = vmatmul.f32.gmra.mxu0 %v266
      %v412 = vpop.f32.mrf.mxu0
      %v413 = vadd.f32 %v348, %v412
      %414 = vmatmul.f32.gmra.mxu0 %v268
      %v415 = vpop.f32.mrf.mxu0
      %v416 = vadd.f32 %v351, %v415
      %417 = vmatmul.f32.gmra.mxu0 %v270
      %v418 = vpop.f32.mrf.mxu0
      %v419 = vadd.f32 %v354, %v418
      %420 = vmatmul.f32.gmra.mxu0 %v272
      %v421 = vpop.f32.mrf.mxu0
      %v422 = vadd.f32 %v357, %v421
      %423 = vmatmul.f32.gmra.mxu0 %v274
      %v424 = vpop.f32.mrf.mxu0
      %v425 = vadd.f32 %v360, %v424
      %426 = vmatmul.f32.gmra.mxu0 %v276
      %v427 = vpop.f32.mrf.mxu0
      %v428 = vadd.f32 %v363, %v427
      %429 = vmatmul.f32.gmra.mxu0 %v278
      %v430 = vpop.f32.mrf.mxu0
      %v431 = vadd.f32 %v366, %v430
      %432 = vmatmul.f32.gmra.mxu0 %v280
      %v433 = vpop.f32.mrf.mxu0
      %v434 = vadd.f32 %v369, %v433
      %435 = vmatmul.f32.gmra.mxu0 %v282
      %v436 = vpop.f32.mrf.mxu0
      %v437 = vadd.f32 %v372, %v436
      %438 = vmatmul.f32.gmra.mxu0 %v284
      %v439 = vpop.f32.mrf.mxu0
      %v440 = vadd.f32 %v375, %v439
      %441 = vmatmul.f32.gmra.mxu0 %v286
      %v442 = vpop.f32.mrf.mxu0
      %v443 = vadd.f32 %v378, %v442
      %444 = vmatmul.f32.gmra.mxu0 %v288
      %v445 = vpop.f32.mrf.mxu0
      %v446 = vadd.f32 %v381, %v445
      %447 = vmatmul.f32.gmra.mxu0 %v290
      %v448 = vpop.f32.mrf.mxu0
      %v449 = vadd.f32 %v384, %v448
      %450 = vmatmul.f32.gmra.mxu0 %v292
      %v451 = vpop.f32.mrf.mxu0
      %v452 = vadd.f32 %v387, %v451
      %453 = vmatmul.f32.gmra.mxu0 %v294
      %v454 = vpop.f32.mrf.mxu0
      %v455 = vadd.f32 %v390, %v454
      %456 = vdwg.mxu0
      %v457 = vadd.f32 %v247, %v410
      %v458 = vadd.f32 %v248, %v413
      %v459 = vadd.f32 %v249, %v416
      %v460 = vadd.f32 %v250, %v419
      %v461 = vadd.f32 %v251, %v422
      %v462 = vadd.f32 %v252, %v425
      %v463 = vadd.f32 %v253, %v428
      %v464 = vadd.f32 %v254, %v431
      %v465 = vadd.f32 %v255, %v434
      %v466 = vadd.f32 %v256, %v437
      %v467 = vadd.f32 %v257, %v440
      %v468 = vadd.f32 %v258, %v443
      %v469 = vadd.f32 %v259, %v446
      %v470 = vadd.f32 %v260, %v449
      %v471 = vadd.f32 %v261, %v452
      %v472 = vadd.f32 %v262, %v455
      %473 = vst [vmem:[#allocation2] sm:$0xff] %v457
      %474 = vst [vmem:[#allocation2 + $0x8] sm:$0xff] %v458
      %475 = vst [vmem:[#allocation2 + $0x10] sm:$0xff] %v459
      %476 = vst [vmem:[#allocation2 + $0x18] sm:$0xff] %v460
      %477 = vst [vmem:[#allocation2 + $0x20] sm:$0xff] %v461
      %478 = vst [vmem:[#allocation2 + $0x28] sm:$0xff] %v462
      %479 = vst [vmem:[#allocation2 + $0x30] sm:$0xff] %v463
      %480 = vst [vmem:[#allocation2 + $0x38] sm:$0xff] %v464
      %481 = vst [vmem:[#allocation2 + $0x40] sm:$0xff] %v465
      %482 = vst [vmem:[#allocation2 + $0x48] sm:$0xff] %v466
      %483 = vst [vmem:[#allocation2 + $0x50] sm:$0xff] %v467
      %484 = vst [vmem:[#allocation2 + $0x58] sm:$0xff] %v468
      %485 = vst [vmem:[#allocation2 + $0x60] sm:$0xff] %v469
      %486 = vst [vmem:[#allocation2 + $0x68] sm:$0xff] %v470
      %487 = vst [vmem:[#allocation2 + $0x70] sm:$0xff] %v471
      %488 = vst [vmem:[#allocation2 + $0x78] sm:$0xff] %v472
      // Predicated region
      $region37: #{_gcn_forward_core.7} parent=31 // pred_check
        %p489 = pneg %p227
      $region38: #{_gcn_forward_core.7} parent=31 // pred_check_branch
        %491 = sbr.rel (%p489) target = $region40
      $region39: #{_gcn_forward_core.7} parent=31 // pred_region
        %v492 = vld [vmem:[#allocation2] sm:$0xff]
        %v493 = vld [vmem:[#allocation2 + $0x8] sm:$0xff]
        %v494 = vld [vmem:[#allocation2 + $0x10] sm:$0xff]
        %v495 = vld [vmem:[#allocation2 + $0x18] sm:$0xff]
        %v496 = vld [vmem:[#allocation2 + $0x20] sm:$0xff]
        %v497 = vld [vmem:[#allocation2 + $0x28] sm:$0xff]
        %v498 = vld [vmem:[#allocation2 + $0x30] sm:$0xff]
        %v499 = vld [vmem:[#allocation2 + $0x38] sm:$0xff]
        %v500 = vld [vmem:[#allocation2 + $0x40] sm:$0xff]
        %v501 = vld [vmem:[#allocation2 + $0x48] sm:$0xff]
        %v502 = vld [vmem:[#allocation2 + $0x50] sm:$0xff]
        %v503 = vld [vmem:[#allocation2 + $0x58] sm:$0xff]
        %v504 = vld [vmem:[#allocation2 + $0x60] sm:$0xff]
        %v505 = vld [vmem:[#allocation2 + $0x68] sm:$0xff]
        %v506 = vld [vmem:[#allocation2 + $0x70] sm:$0xff]
        %v507 = vld [vmem:[#allocation2 + $0x78] sm:$0xff]
        %v508 = vld [vmem:[%s2] sm:$0x1]
        %v510 = vperm.slane %v508, 0
        %v512 = vadd.f32 %v492, %v510
        %v513 = vadd.f32 %v493, %v510
        %v514 = vadd.f32 %v494, %v510
        %v515 = vadd.f32 %v495, %v510
        %v516 = vadd.f32 %v496, %v510
        %v517 = vadd.f32 %v497, %v510
        %v518 = vadd.f32 %v498, %v510
        %v519 = vadd.f32 %v499, %v510
        %v520 = vadd.f32 %v500, %v510
        %v521 = vadd.f32 %v501, %v510
        %v522 = vadd.f32 %v502, %v510
        %v523 = vadd.f32 %v503, %v510
        %v524 = vadd.f32 %v504, %v510
        %v525 = vadd.f32 %v505, %v510
        %v526 = vadd.f32 %v506, %v510
        %v527 = vadd.f32 %v507, %v510
        %v528 = vmax.f32 %v512, 0.0
        %v529 = vmax.f32 %v513, 0.0
        %v530 = vmax.f32 %v514, 0.0
        %v531 = vmax.f32 %v515, 0.0
        %v532 = vmax.f32 %v516, 0.0
        %v533 = vmax.f32 %v517, 0.0
        %v534 = vmax.f32 %v518, 0.0
        %v535 = vmax.f32 %v519, 0.0
        %v536 = vmax.f32 %v520, 0.0
        %v537 = vmax.f32 %v521, 0.0
        %v538 = vmax.f32 %v522, 0.0
        %v539 = vmax.f32 %v523, 0.0
        %v540 = vmax.f32 %v524, 0.0
        %v541 = vmax.f32 %v525, 0.0
        %v542 = vmax.f32 %v526, 0.0
        %v543 = vmax.f32 %v527, 0.0
        %544 = vst [vmem:[%s225] sm:$0xff] %v528
        %545 = vst [vmem:[%s225 + $0x8] sm:$0xff] %v529
        %546 = vst [vmem:[%s225 + $0x10] sm:$0xff] %v530
        %547 = vst [vmem:[%s225 + $0x18] sm:$0xff] %v531
        %548 = vst [vmem:[%s225 + $0x20] sm:$0xff] %v532
        %549 = vst [vmem:[%s225 + $0x28] sm:$0xff] %v533
        %550 = vst [vmem:[%s225 + $0x30] sm:$0xff] %v534
        %551 = vst [vmem:[%s225 + $0x38] sm:$0xff] %v535
        %552 = vst [vmem:[%s225 + $0x40] sm:$0xff] %v536
        %553 = vst [vmem:[%s225 + $0x48] sm:$0xff] %v537
        %554 = vst [vmem:[%s225 + $0x50] sm:$0xff] %v538
        %555 = vst [vmem:[%s225 + $0x58] sm:$0xff] %v539
        %556 = vst [vmem:[%s225 + $0x60] sm:$0xff] %v540
        %557 = vst [vmem:[%s225 + $0x68] sm:$0xff] %v541
        %558 = vst [vmem:[%s225 + $0x70] sm:$0xff] %v542
        %559 = vst [vmem:[%s225 + $0x78] sm:$0xff] %v543
      $region40: #{_gcn_forward_core.7} parent=31 // pred_fallthru
        _
      %s560 = smul.u32 16, %s18
      %p561 = scmp.lt.s32.totalorder %s560, 31
      %s562 = scalar_select %p561, %s560, 31
      %s563 = smul.addr %s562, 8
      %s564 = scalar_lea.vmem %s3, %s563
      // Predicated region
      $region41: #{_gcn_forward_core.7} parent=31 // pred_check
        %p565 = pneg %p119
      $region42: #{_gcn_forward_core.7} parent=31 // pred_check_branch
        %567 = sbr.rel (%p565) target = $region44
      $region43: #{_gcn_forward_core.7} parent=31 // pred_region
        %s568 = smul.u32 16, %s18
      $region44: #{_gcn_forward_core.7} parent=31 // pred_fallthru
        _
    $region32: #{_gcn_forward_core.7} parent=5 // pred_fallthru
      _
    %p569 = scmp.le.s32.totalorder 2, %s9
    // Predicated region
    $region45: #{_gcn_forward_core.7} parent=5 // pred_check
      %p570 = pneg %p569
    $region46: #{_gcn_forward_core.7} parent=5 // pred_check_branch
      %572 = sbr.rel (%p570) target = $region48
    $region47: #{_gcn_forward_core.7} parent=5 // pred_region
      %s573 = ssub.s32 %s9, 2
      // Predicated region
      $region49: #{_gcn_forward_core.7} parent=47 // pred_check
        %p574 = pneg %p125
      $region50: #{_gcn_forward_core.7} parent=47 // pred_check_branch
        %576 = sbr.rel (%p574) target = $region52
      $region51: #{_gcn_forward_core.7} parent=47 // pred_region
        %s577 = smul.u32 16, %s20
        %p578 = scmp.lt.s32.totalorder %s577, 31
        %s579 = scalar_select %p578, %s577, 31
        %s580 = smul.addr %s579, 8
        %s581 = scalar_lea.vmem %s3, %s580
      $region52: #{_gcn_forward_core.7} parent=47 // pred_fallthru
        _
    $region48: #{_gcn_forward_core.7} parent=5 // pred_fallthru
      _
  $region6: #{_gcn_forward_core.7} parent=0 // loop_footer
    %s13 = sadd.s32 1, %s9
  $region7: #{_gcn_forward_core.7} parent=0 // loop_footer_branch
    %8 = sbr.rel target = $region3
  $region8: #{_gcn_forward_core.7} parent=0 // loop_exit
    _

// kernel: _gcn_forward_core.11
$region0: #{_gcn_forward_core.11}
  #allocation0 [shape = 'u32[]', space=smem, size = 0x4, offset = 0x4, fixed_abs, tag = 'smem constant byte address 0x4 - core index']
  #allocation1 [shape = 'u32[72,128]{1,0:T(1,128)}', space=vmem, size = 0x9000, scoped, tag = 'internal scratch']
  #allocation2 [shape = 'f32[128,128]{1,0:T(8,128)}', space=vmem, size = 0x10000, scoped, tag = 'scratch operand']
  %s0 = inlined_call_operand.vmem [shape: f32[256,256], index: 0, kind: input, shape index: {}]
  %s1 = inlined_call_operand.vmem [shape: f32[256,128], index: 1, kind: input, shape index: {}]
  %s2 = inlined_call_operand.vmem [shape: f32[1,128], index: 2, kind: input, shape index: {}]
  %s3 = inlined_call_operand.vmem [shape: f32[256,128], index: 3, kind: output, shape index: {}]
  %s4 = sld [smem:[#allocation0]]
  $region53: #{_gcn_forward_core.11} parent=0
    _
  %s6 = ssub.s32 1, %s4
  %s7 = scalar_select 0, %s6, %s4
  loop: start=0, step=1, limit=4
  $region2: #{_gcn_forward_core.11} parent=0 // loop_pre_header
    _
  $region3: #{_gcn_forward_core.11} parent=0 // loop_header
    %s9 = sphi 0, %s13
    %p10 = scmp.ge.s32.totalorder %s9, 4
    %s16 = sphi 0, %s28
    %s17 = sphi 0, %s24
    %s18 = sphi 0, %s16
    %s19 = sphi 0, %s17
    %s20 = sphi 0, %s18
    %s21 = sphi 0, %s19
    %s33 = sphi 0, %s35
    %s36 = sphi 0, %s33
    %s37 = sphi 0, %s36
    %s53 = sphi 0, %s37
    %s59 = sphi 0, %s61
    %s62 = sphi 0, %s59
    %s63 = sphi 0, %s62
    %s79 = sphi 0, %s63
    %s83 = sphi 0, %s83
    %s85 = sphi 0, %s83
    %s86 = sphi 0, %s85
    %s100 = sphi 0, %s86
    %s106 = sphi 0, %s108
    %s109 = sphi 0, %s106
    %s110 = sphi 0, %s109
    %s126 = sphi 0, %s110
  $region4: #{_gcn_forward_core.11} parent=0 // loop_header_branch
    %12 = sbr.rel (%p10) target = $region8
  $region5: #{_gcn_forward_core.11} parent=0 // loop_body
    %s14 = ssub.s32 %s9, 1
    %s15 = ssub.s32 %s9, 2
    %s22 = sadd.s32 1, %s17
    %p23 = scmp.ge.s32.totalorder %s22, 1
    %s24 = scalar_select %p23, 0, %s22
    %s25 = sadd.s32 1, %s16
    %s26 = scalar_select %p23, %s25, %s16
    %p27 = scmp.ge.s32.totalorder %s26, 2
    %s28 = scalar_select %p27, 0, %s26
    %s29 = ssub.s32 %s16, %s28
    %s30 = ssub.s32 %s17, %s24
    %s31 = sor.u32 %s29, %s30
    %p32 = scmp.eq.s32.totalorder %s31, 0
    %s34 = sadd.s32 %s33, 1
    %s35 = scalar_select %p32, %s33, %s34
    %p38 = pneg %p32
    %p39 = scmp.eq.s32.totalorder %s9, 1
    %p40 = por %p38, %p39
    %p41 = scmp.ne.s32.totalorder %s33, %s36
    %p42 = scmp.eq.s32.totalorder %s9, 0
    %p43 = por %p41, %p42
    %p44 = scmp.ne.s32.totalorder %s33, %s36
    %p45 = scmp.eq.s32.totalorder %s14, 1
    %p46 = por %p44, %p45
    %p47 = scmp.ne.s32.totalorder %s36, %s37
    %p48 = scmp.eq.s32.totalorder %s14, 0
    %p49 = por %p47, %p48
    %p50 = scmp.ne.s32.totalorder %s36, %s37
    %p51 = scmp.eq.s32.totalorder %s15, 1
    %p52 = por %p50, %p51
    %p54 = scmp.ne.s32.totalorder %s37, %s53
    %p55 = scmp.eq.s32.totalorder %s15, 0
    %p56 = por %p54, %p55
    %s57 = ssub.s32 %s17, %s24
    %p58 = scmp.eq.s32.totalorder %s57, 0
    %s60 = sadd.s32 %s59, 1
    %s61 = scalar_select %p58, %s59, %s60
    %p64 = pneg %p58
    %p65 = scmp.eq.s32.totalorder %s9, 1
    %p66 = por %p64, %p65
    %p67 = scmp.ne.s32.totalorder %s59, %s62
    %p68 = scmp.eq.s32.totalorder %s9, 0
    %p69 = por %p67, %p68
    %p70 = scmp.ne.s32.totalorder %s59, %s62
    %p71 = scmp.eq.s32.totalorder %s14, 1
    %p72 = por %p70, %p71
    %p73 = scmp.ne.s32.totalorder %s62, %s63
    %p74 = scmp.eq.s32.totalorder %s14, 0
    %p75 = por %p73, %p74
    %p76 = scmp.ne.s32.totalorder %s62, %s63
    %p77 = scmp.eq.s32.totalorder %s15, 1
    %p78 = por %p76, %p77
    %p80 = scmp.ne.s32.totalorder %s63, %s79
    %p81 = scmp.eq.s32.totalorder %s15, 0
    %p82 = por %p80, %p81
    %s84 = sadd.s32 %s83, 1
    %p87 = scmp.eq.s32.totalorder %s9, 1
    %p88 = scmp.ne.s32.totalorder %s83, %s85
    %p89 = scmp.eq.s32.totalorder %s9, 0
    %p90 = por %p88, %p89
    %p91 = scmp.ne.s32.totalorder %s83, %s85
    %p92 = scmp.eq.s32.totalorder %s14, 1
    %p93 = por %p91, %p92
    %p94 = scmp.ne.s32.totalorder %s85, %s86
    %p95 = scmp.eq.s32.totalorder %s14, 0
    %p96 = por %p94, %p95
    %p97 = scmp.ne.s32.totalorder %s85, %s86
    %p98 = scmp.eq.s32.totalorder %s15, 1
    %p99 = por %p97, %p98
    %p101 = scmp.ne.s32.totalorder %s86, %s100
    %p102 = scmp.eq.s32.totalorder %s15, 0
    %p103 = por %p101, %p102
    %s104 = ssub.s32 %s16, %s28
    %p105 = scmp.eq.s32.totalorder %s104, 0
    %s107 = sadd.s32 %s106, 1
    %s108 = scalar_select %p105, %s106, %s107
    %p111 = pneg %p105
    %p112 = scmp.eq.s32.totalorder %s9, 1
    %p113 = por %p111, %p112
    %p114 = scmp.ne.s32.totalorder %s106, %s109
    %p115 = scmp.eq.s32.totalorder %s9, 0
    %p116 = por %p114, %p115
    %p117 = scmp.ne.s32.totalorder %s106, %s109
    %p118 = scmp.eq.s32.totalorder %s14, 1
    %p119 = por %p117, %p118
    %p120 = scmp.ne.s32.totalorder %s109, %s110
    %p121 = scmp.eq.s32.totalorder %s14, 0
    %p122 = por %p120, %p121
    %p123 = scmp.ne.s32.totalorder %s109, %s110
    %p124 = scmp.eq.s32.totalorder %s15, 1
    %p125 = por %p123, %p124
    %p127 = scmp.ne.s32.totalorder %s110, %s126
    %p128 = scmp.eq.s32.totalorder %s15, 0
    %p129 = por %p127, %p128
    %p130 = scmp.le.s32.totalorder 1, %s9
    %p131 = scmp.lt.s32.totalorder %s9, 3
    %p132 = pnand %p130, %p131
    %p133 = pneg %p132
    // Predicated region
    $region9: #{_gcn_forward_core.11} parent=5 // pred_check
      _
    $region10: #{_gcn_forward_core.11} parent=5 // pred_check_branch
      %135 = sbr.rel (%p132) target = $region12
    $region11: #{_gcn_forward_core.11} parent=5 // pred_region
      %s136 = ssub.s32 %s9, 1
      // Predicated region
      $region13: #{_gcn_forward_core.11} parent=11 // pred_check
        %p137 = pneg %p75
      $region14: #{_gcn_forward_core.11} parent=11 // pred_check_branch
        %139 = sbr.rel (%p137) target = $region16
      $region15: #{_gcn_forward_core.11} parent=11 // pred_region
        %s140 = smul.u32 32, %s19
        %p141 = scmp.lt.s32.totalorder %s140, 31
        %s142 = scalar_select %p141, %s140, 31
        %s143 = smul.addr %s142, 8
        %s144 = scalar_lea.vmem %s1, %s143
        %s145 = smul.u32 32, %s19
      $region16: #{_gcn_forward_core.11} parent=11 // pred_fallthru
        _
      // Predicated region
      $region17: #{_gcn_forward_core.11} parent=11 // pred_check
        %p146 = pneg %p96
      $region18: #{_gcn_forward_core.11} parent=11 // pred_check_branch
        %148 = sbr.rel (%p146) target = $region20
      $region19: #{_gcn_forward_core.11} parent=11 // pred_region
        _
      $region20: #{_gcn_forward_core.11} parent=11 // pred_fallthru
        _
    $region12: #{_gcn_forward_core.11} parent=5 // pred_fallthru
      _
    %p149 = scmp.lt.s32.totalorder %s9, 2
    // Predicated region
    $region21: #{_gcn_forward_core.11} parent=5 // pred_check
      %p150 = pneg %p149
    $region22: #{_gcn_forward_core.11} parent=5 // pred_check_branch
      %152 = sbr.rel (%p150) target = $region24
    $region23: #{_gcn_forward_core.11} parent=5 // pred_region
      // Predicated region
      $region25: #{_gcn_forward_core.11} parent=23 // pred_check
        %p153 = pneg %p43
      $region26: #{_gcn_forward_core.11} parent=23 // pred_check_branch
        %155 = sbr.rel (%p153) target = $region28
      $region27: #{_gcn_forward_core.11} parent=23 // pred_region
        %s156 = smul.u32 16, %s16
        %s157 = smul.u32 2, %s17
        %p158 = scmp.lt.s32.totalorder %s156, 31
        %s159 = scalar_select %p158, %s156, 31
        %p160 = scmp.lt.s32.totalorder %s157, 1
        %s161 = scalar_select %p160, %s157, 1
        %s162 = smul.addr %s159, 2
        %s163 = sadd.s32 %s161, %s162
        %s164 = smul.addr %s163, 8
        %s165 = scalar_lea.vmem %s0, %s164
        %s166 = smul.u32 16, %s16
        %s167 = smul.u32 2, %s17
      $region28: #{_gcn_forward_core.11} parent=23 // pred_fallthru
        _
    $region24: #{_gcn_forward_core.11} parent=5 // pred_fallthru
      _
    %p168 = scmp.le.s32.totalorder 1, %s9
    %p169 = scmp.lt.s32.totalorder %s9, 3
    %p170 = pnand %p168, %p169
    %p171 = pneg %p170
    // Predicated region
    $region29: #{_gcn_forward_core.11} parent=5 // pred_check
      _
    $region30: #{_gcn_forward_core.11} parent=5 // pred_check_branch
      %173 = sbr.rel (%p170) target = $region32
    $region31: #{_gcn_forward_core.11} parent=5 // pred_region
      %s174 = ssub.s32 %s9, 1
      %s175 = smul.u32 16, %s18
      %s176 = smul.u32 2, %s19
      %p177 = scmp.lt.s32.totalorder %s175, 31
      %s178 = scalar_select %p177, %s175, 31
      %p179 = scmp.lt.s32.totalorder %s176, 1
      %s180 = scalar_select %p179, %s176, 1
      %s181 = smul.addr %s178, 2
      %s182 = sadd.s32 %s180, %s181
      %s183 = smul.addr %s182, 8
      %s184 = scalar_lea.vmem %s0, %s183
      %p185 = pneg %p49
      %p186 = pneg %p46
      %s187 = smul.u32 32, %s19
      %p188 = scmp.lt.s32.totalorder %s187, 31
      %s189 = scalar_select %p188, %s187, 31
      %s190 = smul.addr %s189, 8
      %s191 = scalar_lea.vmem %s1, %s190
      %p192 = pneg %p75
      %p193 = pneg %p72
      %p194 = pneg %p96
      %p195 = pneg %p93
      %p196 = pneg %p122
      %p197 = pneg %p119
      %s198 = smul.u32 16, %s18
      %p199 = scmp.lt.s32.totalorder %s198, 31
      %s200 = scalar_select %p199, %s198, 31
      %s201 = smul.addr %s200, 8
      %s202 = scalar_lea.vmem %s3, %s201
      %s203 = smul.u32 16, %s18
      %s204 = smul.u32 2, %s19
      %p205 = scmp.lt.s32.totalorder %s203, 31
      %s206 = scalar_select %p205, %s203, 31
      %p207 = scmp.lt.s32.totalorder %s204, 1
      %s208 = scalar_select %p207, %s204, 1
      %s209 = smul.addr %s206, 2
      %s210 = sadd.s32 %s208, %s209
      %s211 = smul.addr %s210, 8
      %s212 = scalar_lea.vmem %s0, %s211
      %s213 = smul.u32 16, %s18
      %s214 = smul.u32 2, %s19
      %s215 = smul.u32 32, %s19
      %p216 = scmp.lt.s32.totalorder %s215, 31
      %s217 = scalar_select %p216, %s215, 31
      %s218 = smul.addr %s217, 8
      %s219 = scalar_lea.vmem %s1, %s218
      %s220 = smul.u32 32, %s19
      %s221 = smul.u32 16, %s18
      %p222 = scmp.lt.s32.totalorder %s221, 31
      %s223 = scalar_select %p222, %s221, 31
      %s224 = smul.addr %s223, 8
      %s225 = scalar_lea.vmem %s3, %s224
      %s226 = smul.u32 16, %s18
      %p227 = scmp.eq.s32.totalorder %s19, 0
      // Predicated region
      $region33: #{_gcn_forward_core.11} parent=31 // pred_check
        %p228 = pneg %p227
      $region34: #{_gcn_forward_core.11} parent=31 // pred_check_branch
        %230 = sbr.rel (%p228) target = $region36
      $region35: #{_gcn_forward_core.11} parent=31 // pred_region
        %231 = vst [vmem:[#allocation2] sm:$0xff] 0.0
        %232 = vst [vmem:[#allocation2 + $0x8] sm:$0xff] 0.0
        %233 = vst [vmem:[#allocation2 + $0x10] sm:$0xff] 0.0
        %234 = vst [vmem:[#allocation2 + $0x18] sm:$0xff] 0.0
        %235 = vst [vmem:[#allocation2 + $0x20] sm:$0xff] 0.0
        %236 = vst [vmem:[#allocation2 + $0x28] sm:$0xff] 0.0
        %237 = vst [vmem:[#allocation2 + $0x30] sm:$0xff] 0.0
        %238 = vst [vmem:[#allocation2 + $0x38] sm:$0xff] 0.0
        %239 = vst [vmem:[#allocation2 + $0x40] sm:$0xff] 0.0
        %240 = vst [vmem:[#allocation2 + $0x48] sm:$0xff] 0.0
        %241 = vst [vmem:[#allocation2 + $0x50] sm:$0xff] 0.0
        %242 = vst [vmem:[#allocation2 + $0x58] sm:$0xff] 0.0
        %243 = vst [vmem:[#allocation2 + $0x60] sm:$0xff] 0.0
        %244 = vst [vmem:[#allocation2 + $0x68] sm:$0xff] 0.0
        %245 = vst [vmem:[#allocation2 + $0x70] sm:$0xff] 0.0
        %246 = vst [vmem:[#allocation2 + $0x78] sm:$0xff] 0.0
      $region36: #{_gcn_forward_core.11} parent=31 // pred_fallthru
        _
      %v247 = vld [vmem:[#allocation2] sm:$0xff]
      %v248 = vld [vmem:[#allocation2 + $0x8] sm:$0xff]
      %v249 = vld [vmem:[#allocation2 + $0x10] sm:$0xff]
      %v250 = vld [vmem:[#allocation2 + $0x18] sm:$0xff]
      %v251 = vld [vmem:[#allocation2 + $0x20] sm:$0xff]
      %v252 = vld [vmem:[#allocation2 + $0x28] sm:$0xff]
      %v253 = vld [vmem:[#allocation2 + $0x30] sm:$0xff]
      %v254 = vld [vmem:[#allocation2 + $0x38] sm:$0xff]
      %v255 = vld [vmem:[#allocation2 + $0x40] sm:$0xff]
      %v256 = vld [vmem:[#allocation2 + $0x48] sm:$0xff]
      %v257 = vld [vmem:[#allocation2 + $0x50] sm:$0xff]
      %v258 = vld [vmem:[#allocation2 + $0x58] sm:$0xff]
      %v259 = vld [vmem:[#allocation2 + $0x60] sm:$0xff]
      %v260 = vld [vmem:[#allocation2 + $0x68] sm:$0xff]
      %v261 = vld [vmem:[#allocation2 + $0x70] sm:$0xff]
      %v262 = vld [vmem:[#allocation2 + $0x78] sm:$0xff]
      %v263 = vld [vmem:[%s212] sm:$0xff]
      %v264 = vld [vmem:[%s212 + $0x8] sm:$0xff]
      %v265 = vld [vmem:[%s212 + $0x10] sm:$0xff]
      %v266 = vld [vmem:[%s212 + $0x18] sm:$0xff]
      %v267 = vld [vmem:[%s212 + $0x20] sm:$0xff]
      %v268 = vld [vmem:[%s212 + $0x28] sm:$0xff]
      %v269 = vld [vmem:[%s212 + $0x30] sm:$0xff]
      %v270 = vld [vmem:[%s212 + $0x38] sm:$0xff]
      %v271 = vld [vmem:[%s212 + $0x40] sm:$0xff]
      %v272 = vld [vmem:[%s212 + $0x48] sm:$0xff]
      %v273 = vld [vmem:[%s212 + $0x50] sm:$0xff]
      %v274 = vld [vmem:[%s212 + $0x58] sm:$0xff]
      %v275 = vld [vmem:[%s212 + $0x60] sm:$0xff]
      %v276 = vld [vmem:[%s212 + $0x68] sm:$0xff]
      %v277 = vld [vmem:[%s212 + $0x70] sm:$0xff]
      %v278 = vld [vmem:[%s212 + $0x78] sm:$0xff]
      %v279 = vld [vmem:[%s212 + $0x80] sm:$0xff]
      %v280 = vld [vmem:[%s212 + $0x88] sm:$0xff]
      %v281 = vld [vmem:[%s212 + $0x90] sm:$0xff]
      %v282 = vld [vmem:[%s212 + $0x98] sm:$0xff]
      %v283 = vld [vmem:[%s212 + $0xa0] sm:$0xff]
      %v284 = vld [vmem:[%s212 + $0xa8] sm:$0xff]
      %v285 = vld [vmem:[%s212 + $0xb0] sm:$0xff]
      %v286 = vld [vmem:[%s212 + $0xb8] sm:$0xff]
      %v287 = vld [vmem:[%s212 + $0xc0] sm:$0xff]
      %v288 = vld [vmem:[%s212 + $0xc8] sm:$0xff]
      %v289 = vld [vmem:[%s212 + $0xd0] sm:$0xff]
      %v290 = vld [vmem:[%s212 + $0xd8] sm:$0xff]
      %v291 = vld [vmem:[%s212 + $0xe0] sm:$0xff]
      %v292 = vld [vmem:[%s212 + $0xe8] sm:$0xff]
      %v293 = vld [vmem:[%s212 + $0xf0] sm:$0xff]
      %v294 = vld [vmem:[%s212 + $0xf8] sm:$0xff]
      %v295 = vld [vmem:[%s219] sm:$0xff]
      %v296 = vld [vmem:[%s219 + $0x8] sm:$0xff]
      %v297 = vld [vmem:[%s219 + $0x10] sm:$0xff]
      %v298 = vld [vmem:[%s219 + $0x18] sm:$0xff]
      %v299 = vld [vmem:[%s219 + $0x20] sm:$0xff]
      %v300 = vld [vmem:[%s219 + $0x28] sm:$0xff]
      %v301 = vld [vmem:[%s219 + $0x30] sm:$0xff]
      %v302 = vld [vmem:[%s219 + $0x38] sm:$0xff]
      %v303 = vld [vmem:[%s219 + $0x40] sm:$0xff]
      %v304 = vld [vmem:[%s219 + $0x48] sm:$0xff]
      %v305 = vld [vmem:[%s219 + $0x50] sm:$0xff]
      %v306 = vld [vmem:[%s219 + $0x58] sm:$0xff]
      %v307 = vld [vmem:[%s219 + $0x60] sm:$0xff]
      %v308 = vld [vmem:[%s219 + $0x68] sm:$0xff]
      %v309 = vld [vmem:[%s219 + $0x70] sm:$0xff]
      %v310 = vld [vmem:[%s219 + $0x78] sm:$0xff]
      %v311 = vld [vmem:[%s219 + $0x80] sm:$0xff]
      %v312 = vld [vmem:[%s219 + $0x88] sm:$0xff]
      %v313 = vld [vmem:[%s219 + $0x90] sm:$0xff]
      %v314 = vld [vmem:[%s219 + $0x98] sm:$0xff]
      %v315 = vld [vmem:[%s219 + $0xa0] sm:$0xff]
      %v316 = vld [vmem:[%s219 + $0xa8] sm:$0xff]
      %v317 = vld [vmem:[%s219 + $0xb0] sm:$0xff]
      %v318 = vld [vmem:[%s219 + $0xb8] sm:$0xff]
      %v319 = vld [vmem:[%s219 + $0xc0] sm:$0xff]
      %v320 = vld [vmem:[%s219 + $0xc8] sm:$0xff]
      %v321 = vld [vmem:[%s219 + $0xd0] sm:$0xff]
      %v322 = vld [vmem:[%s219 + $0xd8] sm:$0xff]
      %v323 = vld [vmem:[%s219 + $0xe0] sm:$0xff]
      %v324 = vld [vmem:[%s219 + $0xe8] sm:$0xff]
      %v325 = vld [vmem:[%s219 + $0xf0] sm:$0xff]
      %v326 = vld [vmem:[%s219 + $0xf8] sm:$0xff]
      %327 = vmatpush.msra.mxu0 %v310
      %328 = vmatpush.msra.mxu0 %v309
      %329 = vmatpush.msra.mxu0 %v308
      %330 = vmatpush.msra.mxu0 %v307
      %331 = vmatpush.msra.mxu0 %v306
      %332 = vmatpush.msra.mxu0 %v305
      %333 = vmatpush.msra.mxu0 %v304
      %334 = vmatpush.msra.mxu0 %v303
      %335 = vmatpush.msra.mxu0 %v302
      %336 = vmatpush.msra.mxu0 %v301
      %337 = vmatpush.msra.mxu0 %v300
      %338 = vmatpush.msra.mxu0 %v299
      %339 = vmatpush.msra.mxu0 %v298
      %340 = vmatpush.msra.mxu0 %v297
      %341 = vmatpush.msra.mxu0 %v296
      %342 = vmatpush.msra.mxu0 %v295
      %343 = vmatmul.f32.gmra.mxu0 %v263
      %v344 = vpop.f32.mrf.mxu0
      %v345 = vadd.f32 0.0, %v344
      %346 = vmatmul.f32.gmra.mxu0 %v265
      %v347 = vpop.f32.mrf.mxu0
      %v348 = vadd.f32 0.0, %v347
      %349 = vmatmul.f32.gmra.mxu0 %v267
      %v350 = vpop.f32.mrf.mxu0
      %v351 = vadd.f32 0.0, %v350
      %352 = vmatmul.f32.gmra.mxu0 %v269
      %v353 = vpop.f32.mrf.mxu0
      %v354 = vadd.f32 0.0, %v353
      %355 = vmatmul.f32.gmra.mxu0 %v271
      %v356 = vpop.f32.mrf.mxu0
      %v357 = vadd.f32 0.0, %v356
      %358 = vmatmul.f32.gmra.mxu0 %v273
      %v359 = vpop.f32.mrf.mxu0
      %v360 = vadd.f32 0.0, %v359
      %361 = vmatmul.f32.gmra.mxu0 %v275
      %v362 = vpop.f32.mrf.mxu0
      %v363 = vadd.f32 0.0, %v362
      %364 = vmatmul.f32.gmra.mxu0 %v277
      %v365 = vpop.f32.mrf.mxu0
      %v366 = vadd.f32 0.0, %v365
      %367 = vmatmul.f32.gmra.mxu0 %v279
      %v368 = vpop.f32.mrf.mxu0
      %v369 = vadd.f32 0.0, %v368
      %370 = vmatmul.f32.gmra.mxu0 %v281
      %v371 = vpop.f32.mrf.mxu0
      %v372 = vadd.f32 0.0, %v371
      %373 = vmatmul.f32.gmra.mxu0 %v283
      %v374 = vpop.f32.mrf.mxu0
      %v375 = vadd.f32 0.0, %v374
      %376 = vmatmul.f32.gmra.mxu0 %v285
      %v377 = vpop.f32.mrf.mxu0
      %v378 = vadd.f32 0.0, %v377
      %379 = vmatmul.f32.gmra.mxu0 %v287
      %v380 = vpop.f32.mrf.mxu0
      %v381 = vadd.f32 0.0, %v380
      %382 = vmatmul.f32.gmra.mxu0 %v289
      %v383 = vpop.f32.mrf.mxu0
      %v384 = vadd.f32 0.0, %v383
      %385 = vmatmul.f32.gmra.mxu0 %v291
      %v386 = vpop.f32.mrf.mxu0
      %v387 = vadd.f32 0.0, %v386
      %388 = vmatmul.f32.gmra.mxu0 %v293
      %v389 = vpop.f32.mrf.mxu0
      %v390 = vadd.f32 0.0, %v389
      %391 = vdwg.mxu0
      %392 = vmatpush.msra.mxu0 %v326
      %393 = vmatpush.msra.mxu0 %v325
      %394 = vmatpush.msra.mxu0 %v324
      %395 = vmatpush.msra.mxu0 %v323
      %396 = vmatpush.msra.mxu0 %v322
      %397 = vmatpush.msra.mxu0 %v321
      %398 = vmatpush.msra.mxu0 %v320
      %399 = vmatpush.msra.mxu0 %v319
      %400 = vmatpush.msra.mxu0 %v318
      %401 = vmatpush.msra.mxu0 %v317
      %402 = vmatpush.msra.mxu0 %v316
      %403 = vmatpush.msra.mxu0 %v315
      %404 = vmatpush.msra.mxu0 %v314
      %405 = vmatpush.msra.mxu0 %v313
      %406 = vmatpush.msra.mxu0 %v312
      %407 = vmatpush.msra.mxu0 %v311
      %408 = vmatmul.f32.gmra.mxu0 %v264
      %v409 = vpop.f32.mrf.mxu0
      %v410 = vadd.f32 %v345, %v409
      %411 = vmatmul.f32.gmra.mxu0 %v266
      %v412 = vpop.f32.mrf.mxu0
      %v413 = vadd.f32 %v348, %v412
      %414 = vmatmul.f32.gmra.mxu0 %v268
      %v415 = vpop.f32.mrf.mxu0
      %v416 = vadd.f32 %v351, %v415
      %417 = vmatmul.f32.gmra.mxu0 %v270
      %v418 = vpop.f32.mrf.mxu0
      %v419 = vadd.f32 %v354, %v418
      %420 = vmatmul.f32.gmra.mxu0 %v272
      %v421 = vpop.f32.mrf.mxu0
      %v422 = vadd.f32 %v357, %v421
      %423 = vmatmul.f32.gmra.mxu0 %v274
      %v424 = vpop.f32.mrf.mxu0
      %v425 = vadd.f32 %v360, %v424
      %426 = vmatmul.f32.gmra.mxu0 %v276
      %v427 = vpop.f32.mrf.mxu0
      %v428 = vadd.f32 %v363, %v427
      %429 = vmatmul.f32.gmra.mxu0 %v278
      %v430 = vpop.f32.mrf.mxu0
      %v431 = vadd.f32 %v366, %v430
      %432 = vmatmul.f32.gmra.mxu0 %v280
      %v433 = vpop.f32.mrf.mxu0
      %v434 = vadd.f32 %v369, %v433
      %435 = vmatmul.f32.gmra.mxu0 %v282
      %v436 = vpop.f32.mrf.mxu0
      %v437 = vadd.f32 %v372, %v436
      %438 = vmatmul.f32.gmra.mxu0 %v284
      %v439 = vpop.f32.mrf.mxu0
      %v440 = vadd.f32 %v375, %v439
      %441 = vmatmul.f32.gmra.mxu0 %v286
      %v442 = vpop.f32.mrf.mxu0
      %v443 = vadd.f32 %v378, %v442
      %444 = vmatmul.f32.gmra.mxu0 %v288
      %v445 = vpop.f32.mrf.mxu0
      %v446 = vadd.f32 %v381, %v445
      %447 = vmatmul.f32.gmra.mxu0 %v290
      %v448 = vpop.f32.mrf.mxu0
      %v449 = vadd.f32 %v384, %v448
      %450 = vmatmul.f32.gmra.mxu0 %v292
      %v451 = vpop.f32.mrf.mxu0
      %v452 = vadd.f32 %v387, %v451
      %453 = vmatmul.f32.gmra.mxu0 %v294
      %v454 = vpop.f32.mrf.mxu0
      %v455 = vadd.f32 %v390, %v454
      %456 = vdwg.mxu0
      %v457 = vadd.f32 %v247, %v410
      %v458 = vadd.f32 %v248, %v413
      %v459 = vadd.f32 %v249, %v416
      %v460 = vadd.f32 %v250, %v419
      %v461 = vadd.f32 %v251, %v422
      %v462 = vadd.f32 %v252, %v425
      %v463 = vadd.f32 %v253, %v428
      %v464 = vadd.f32 %v254, %v431
      %v465 = vadd.f32 %v255, %v434
      %v466 = vadd.f32 %v256, %v437
      %v467 = vadd.f32 %v257, %v440
      %v468 = vadd.f32 %v258, %v443
      %v469 = vadd.f32 %v259, %v446
      %v470 = vadd.f32 %v260, %v449
      %v471 = vadd.f32 %v261, %v452
      %v472 = vadd.f32 %v262, %v455
      %473 = vst [vmem:[#allocation2] sm:$0xff] %v457
      %474 = vst [vmem:[#allocation2 + $0x8] sm:$0xff] %v458
      %475 = vst [vmem:[#allocation2 + $0x10] sm:$0xff] %v459
      %476 = vst [vmem:[#allocation2 + $0x18] sm:$0xff] %v460
      %477 = vst [vmem:[#allocation2 + $0x20] sm:$0xff] %v461
      %478 = vst [vmem:[#allocation2 + $0x28] sm:$0xff] %v462
      %479 = vst [vmem:[#allocation2 + $0x30] sm:$0xff] %v463
      %480 = vst [vmem:[#allocation2 + $0x38] sm:$0xff] %v464
      %481 = vst [vmem:[#allocation2 + $0x40] sm:$0xff] %v465
      %482 = vst [vmem:[#allocation2 + $0x48] sm:$0xff] %v466
      %483 = vst [vmem:[#allocation2 + $0x50] sm:$0xff] %v467
      %484 = vst [vmem:[#allocation2 + $0x58] sm:$0xff] %v468
      %485 = vst [vmem:[#allocation2 + $0x60] sm:$0xff] %v469
      %486 = vst [vmem:[#allocation2 + $0x68] sm:$0xff] %v470
      %487 = vst [vmem:[#allocation2 + $0x70] sm:$0xff] %v471
      %488 = vst [vmem:[#allocation2 + $0x78] sm:$0xff] %v472
      // Predicated region
      $region37: #{_gcn_forward_core.11} parent=31 // pred_check
        %p489 = pneg %p227
      $region38: #{_gcn_forward_core.11} parent=31 // pred_check_branch
        %491 = sbr.rel (%p489) target = $region40
      $region39: #{_gcn_forward_core.11} parent=31 // pred_region
        %v492 = vld [vmem:[#allocation2] sm:$0xff]
        %v493 = vld [vmem:[#allocation2 + $0x8] sm:$0xff]
        %v494 = vld [vmem:[#allocation2 + $0x10] sm:$0xff]
        %v495 = vld [vmem:[#allocation2 + $0x18] sm:$0xff]
        %v496 = vld [vmem:[#allocation2 + $0x20] sm:$0xff]
        %v497 = vld [vmem:[#allocation2 + $0x28] sm:$0xff]
        %v498 = vld [vmem:[#allocation2 + $0x30] sm:$0xff]
        %v499 = vld [vmem:[#allocation2 + $0x38] sm:$0xff]
        %v500 = vld [vmem:[#allocation2 + $0x40] sm:$0xff]
        %v501 = vld [vmem:[#allocation2 + $0x48] sm:$0xff]
        %v502 = vld [vmem:[#allocation2 + $0x50] sm:$0xff]
        %v503 = vld [vmem:[#allocation2 + $0x58] sm:$0xff]
        %v504 = vld [vmem:[#allocation2 + $0x60] sm:$0xff]
        %v505 = vld [vmem:[#allocation2 + $0x68] sm:$0xff]
        %v506 = vld [vmem:[#allocation2 + $0x70] sm:$0xff]
        %v507 = vld [vmem:[#allocation2 + $0x78] sm:$0xff]
        %v508 = vld [vmem:[%s2] sm:$0x1]
        %v510 = vperm.slane %v508, 0
        %v512 = vadd.f32 %v492, %v510
        %v513 = vadd.f32 %v493, %v510
        %v514 = vadd.f32 %v494, %v510
        %v515 = vadd.f32 %v495, %v510
        %v516 = vadd.f32 %v496, %v510
        %v517 = vadd.f32 %v497, %v510
        %v518 = vadd.f32 %v498, %v510
        %v519 = vadd.f32 %v499, %v510
        %v520 = vadd.f32 %v500, %v510
        %v521 = vadd.f32 %v501, %v510
        %v522 = vadd.f32 %v502, %v510
        %v523 = vadd.f32 %v503, %v510
        %v524 = vadd.f32 %v504, %v510
        %v525 = vadd.f32 %v505, %v510
        %v526 = vadd.f32 %v506, %v510
        %v527 = vadd.f32 %v507, %v510
        %v528 = vlaneseq
        %v529 = vand.u32 %v528, 127
        %vm530 = vcmp.lt.s32.totalorder %v529, 40
        %v531 = vsel %vm530, %v512, -1e+30
        %v532 = vsel %vm530, %v513, -1e+30
        %v533 = vsel %vm530, %v514, -1e+30
        %v534 = vsel %vm530, %v515, -1e+30
        %v535 = vsel %vm530, %v516, -1e+30
        %v536 = vsel %vm530, %v517, -1e+30
        %v537 = vsel %vm530, %v518, -1e+30
        %v538 = vsel %vm530, %v519, -1e+30
        %v539 = vsel %vm530, %v520, -1e+30
        %v540 = vsel %vm530, %v521, -1e+30
        %v541 = vsel %vm530, %v522, -1e+30
        %v542 = vsel %vm530, %v523, -1e+30
        %v543 = vsel %vm530, %v524, -1e+30
        %v544 = vsel %vm530, %v525, -1e+30
        %v545 = vsel %vm530, %v526, -1e+30
        %v546 = vsel %vm530, %v527, -1e+30
        %547 = vmax.xlane.f32.xlu0 %v531
        %v548 = vpop.xlane.xlu0 %547
        %549 = vmax.xlane.f32.xlu0 %v532
        %v550 = vpop.xlane.xlu0 %549
        %551 = vmax.xlane.f32.xlu0 %v533
        %v552 = vpop.xlane.xlu0 %551
        %553 = vmax.xlane.f32.xlu0 %v534
        %v554 = vpop.xlane.xlu0 %553
        %555 = vmax.xlane.f32.xlu0 %v535
        %v556 = vpop.xlane.xlu0 %555
        %557 = vmax.xlane.f32.xlu0 %v536
        %v558 = vpop.xlane.xlu0 %557
        %559 = vmax.xlane.f32.xlu0 %v537
        %v560 = vpop.xlane.xlu0 %559
        %561 = vmax.xlane.f32.xlu0 %v538
        %v562 = vpop.xlane.xlu0 %561
        %563 = vmax.xlane.f32.xlu0 %v539
        %v564 = vpop.xlane.xlu0 %563
        %565 = vmax.xlane.f32.xlu0 %v540
        %v566 = vpop.xlane.xlu0 %565
        %567 = vmax.xlane.f32.xlu0 %v541
        %v568 = vpop.xlane.xlu0 %567
        %569 = vmax.xlane.f32.xlu0 %v542
        %v570 = vpop.xlane.xlu0 %569
        %571 = vmax.xlane.f32.xlu0 %v543
        %v572 = vpop.xlane.xlu0 %571
        %573 = vmax.xlane.f32.xlu0 %v544
        %v574 = vpop.xlane.xlu0 %573
        %575 = vmax.xlane.f32.xlu0 %v545
        %v576 = vpop.xlane.xlu0 %575
        %577 = vmax.xlane.f32.xlu0 %v546
        %v578 = vpop.xlane.xlu0 %577
        %v579 = vsub.f32 %v531, %v548
        %v580 = vsub.f32 %v532, %v550
        %v581 = vsub.f32 %v533, %v552
        %v582 = vsub.f32 %v534, %v554
        %v583 = vsub.f32 %v535, %v556
        %v584 = vsub.f32 %v536, %v558
        %v585 = vsub.f32 %v537, %v560
        %v586 = vsub.f32 %v538, %v562
        %v587 = vsub.f32 %v539, %v564
        %v588 = vsub.f32 %v540, %v566
        %v589 = vsub.f32 %v541, %v568
        %v590 = vsub.f32 %v542, %v570
        %v591 = vsub.f32 %v543, %v572
        %v592 = vsub.f32 %v544, %v574
        %v593 = vsub.f32 %v545, %v576
        %v594 = vsub.f32 %v546, %v578
        %v595 = vmul.f32 %v579, 1.442695
        %v596 = vpow.pop %v595
        %v597 = vmul.f32 %v580, 1.442695
        %v598 = vpow.pop %v597
        %v599 = vmul.f32 %v581, 1.442695
        %v600 = vpow.pop %v599
        %v601 = vmul.f32 %v582, 1.442695
        %v602 = vpow.pop %v601
        %v603 = vmul.f32 %v583, 1.442695
        %v604 = vpow.pop %v603
        %v605 = vmul.f32 %v584, 1.442695
        %v606 = vpow.pop %v605
        %v607 = vmul.f32 %v585, 1.442695
        %v608 = vpow.pop %v607
        %v609 = vmul.f32 %v586, 1.442695
        %v610 = vpow.pop %v609
        %v611 = vmul.f32 %v587, 1.442695
        %v612 = vpow.pop %v611
        %v613 = vmul.f32 %v588, 1.442695
        %v614 = vpow.pop %v613
        %v615 = vmul.f32 %v589, 1.442695
        %v616 = vpow.pop %v615
        %v617 = vmul.f32 %v590, 1.442695
        %v618 = vpow.pop %v617
        %v619 = vmul.f32 %v591, 1.442695
        %v620 = vpow.pop %v619
        %v621 = vmul.f32 %v592, 1.442695
        %v622 = vpow.pop %v621
        %v623 = vmul.f32 %v593, 1.442695
        %v624 = vpow.pop %v623
        %v625 = vmul.f32 %v594, 1.442695
        %v626 = vpow.pop %v625
        %627 = vadd.xlane.f32.xlu0 %v596
        %v628 = vpop.xlane.xlu0 %627
        %629 = vadd.xlane.f32.xlu0 %v598
        %v630 = vpop.xlane.xlu0 %629
        %631 = vadd.xlane.f32.xlu0 %v600
        %v632 = vpop.xlane.xlu0 %631
        %633 = vadd.xlane.f32.xlu0 %v602
        %v634 = vpop.xlane.xlu0 %633
        %635 = vadd.xlane.f32.xlu0 %v604
        %v636 = vpop.xlane.xlu0 %635
        %637 = vadd.xlane.f32.xlu0 %v606
        %v638 = vpop.xlane.xlu0 %637
        %639 = vadd.xlane.f32.xlu0 %v608
        %v640 = vpop.xlane.xlu0 %639
        %641 = vadd.xlane.f32.xlu0 %v610
        %v642 = vpop.xlane.xlu0 %641
        %643 = vadd.xlane.f32.xlu0 %v612
        %v644 = vpop.xlane.xlu0 %643
        %645 = vadd.xlane.f32.xlu0 %v614
        %v646 = vpop.xlane.xlu0 %645
        %647 = vadd.xlane.f32.xlu0 %v616
        %v648 = vpop.xlane.xlu0 %647
        %649 = vadd.xlane.f32.xlu0 %v618
        %v650 = vpop.xlane.xlu0 %649
        %651 = vadd.xlane.f32.xlu0 %v620
        %v652 = vpop.xlane.xlu0 %651
        %653 = vadd.xlane.f32.xlu0 %v622
        %v654 = vpop.xlane.xlu0 %653
        %655 = vadd.xlane.f32.xlu0 %v624
        %v656 = vpop.xlane.xlu0 %655
        %657 = vadd.xlane.f32.xlu0 %v626
        %v658 = vpop.xlane.xlu0 %657
        %v659 = vlog2.pop %v628
        %v660 = vmul.f32 %v659, 0.6931472
        %v661 = vlog2.pop %v630
        %v662 = vmul.f32 %v661, 0.6931472
        %v663 = vlog2.pop %v632
        %v664 = vmul.f32 %v663, 0.6931472
        %v665 = vlog2.pop %v634
        %v666 = vmul.f32 %v665, 0.6931472
        %v667 = vlog2.pop %v636
        %v668 = vmul.f32 %v667, 0.6931472
        %v669 = vlog2.pop %v638
        %v670 = vmul.f32 %v669, 0.6931472
        %v671 = vlog2.pop %v640
        %v672 = vmul.f32 %v671, 0.6931472
        %v673 = vlog2.pop %v642
        %v674 = vmul.f32 %v673, 0.6931472
        %v675 = vlog2.pop %v644
        %v676 = vmul.f32 %v675, 0.6931472
        %v677 = vlog2.pop %v646
        %v678 = vmul.f32 %v677, 0.6931472
        %v679 = vlog2.pop %v648
        %v680 = vmul.f32 %v679, 0.6931472
        %v681 = vlog2.pop %v650
        %v682 = vmul.f32 %v681, 0.6931472
        %v683 = vlog2.pop %v652
        %v684 = vmul.f32 %v683, 0.6931472
        %v685 = vlog2.pop %v654
        %v686 = vmul.f32 %v685, 0.6931472
        %v687 = vlog2.pop %v656
        %v688 = vmul.f32 %v687, 0.6931472
        %v689 = vlog2.pop %v658
        %v690 = vmul.f32 %v689, 0.6931472
        %v691 = vsub.f32 %v579, %v660
        %v692 = vsub.f32 %v580, %v662
        %v693 = vsub.f32 %v581, %v664
        %v694 = vsub.f32 %v582, %v666
        %v695 = vsub.f32 %v583, %v668
        %v696 = vsub.f32 %v584, %v670
        %v697 = vsub.f32 %v585, %v672
        %v698 = vsub.f32 %v586, %v674
        %v699 = vsub.f32 %v587, %v676
        %v700 = vsub.f32 %v588, %v678
        %v701 = vsub.f32 %v589, %v680
        %v702 = vsub.f32 %v590, %v682
        %v703 = vsub.f32 %v591, %v684
        %v704 = vsub.f32 %v592, %v686
        %v705 = vsub.f32 %v593, %v688
        %v706 = vsub.f32 %v594, %v690
        %707 = vst [vmem:[%s225] sm:$0xff] %v691
        %708 = vst [vmem:[%s225 + $0x8] sm:$0xff] %v692
        %709 = vst [vmem:[%s225 + $0x10] sm:$0xff] %v693
        %710 = vst [vmem:[%s225 + $0x18] sm:$0xff] %v694
        %711 = vst [vmem:[%s225 + $0x20] sm:$0xff] %v695
        %712 = vst [vmem:[%s225 + $0x28] sm:$0xff] %v696
        %713 = vst [vmem:[%s225 + $0x30] sm:$0xff] %v697
        %714 = vst [vmem:[%s225 + $0x38] sm:$0xff] %v698
        %715 = vst [vmem:[%s225 + $0x40] sm:$0xff] %v699
        %716 = vst [vmem:[%s225 + $0x48] sm:$0xff] %v700
        %717 = vst [vmem:[%s225 + $0x50] sm:$0xff] %v701
        %718 = vst [vmem:[%s225 + $0x58] sm:$0xff] %v702
        %719 = vst [vmem:[%s225 + $0x60] sm:$0xff] %v703
        %720 = vst [vmem:[%s225 + $0x68] sm:$0xff] %v704
        %721 = vst [vmem:[%s225 + $0x70] sm:$0xff] %v705
        %722 = vst [vmem:[%s225 + $0x78] sm:$0xff] %v706
      $region40: #{_gcn_forward_core.11} parent=31 // pred_fallthru
        _
      %s723 = smul.u32 16, %s18
      %p724 = scmp.lt.s32.totalorder %s723, 31
      %s725 = scalar_select %p724, %s723, 31
      %s726 = smul.addr %s725, 8
      %s727 = scalar_lea.vmem %s3, %s726
      // Predicated region
      $region41: #{_gcn_forward_core.11} parent=31 // pred_check
        %p728 = pneg %p119
      $region42: #{_gcn_forward_core.11} parent=31 // pred_check_branch
        %730 = sbr.rel (%p728) target = $region44
      $region43: #{_gcn_forward_core.11} parent=31 // pred_region
        %s731 = smul.u32 16, %s18
      $region44: #{_gcn_forward_core.11} parent=31 // pred_fallthru
        _
    $region32: #{_gcn_forward_core.11} parent=5 // pred_fallthru
      _
    %p732 = scmp.le.s32.totalorder 2, %s9
    // Predicated region
    $region45: #{_gcn_forward_core.11} parent=5 // pred_check
      %p733 = pneg %p732
    $region46: #{_gcn_forward_core.11} parent=5 // pred_check_branch
      %735 = sbr.rel (%p733) target = $region48
    $region47: #{_gcn_forward_core.11} parent=5 // pred_region
      %s736 = ssub.s32 %s9, 2
      // Predicated region
      $region49: #{_gcn_forward_core.11} parent=47 // pred_check
        %p737 = pneg %p125
      $region50: #{_gcn_forward_core.11} parent=47 // pred_check_branch
        %739 = sbr.rel (%p737) target = $region52
      $region51: #{_gcn_forward_core.11} parent=47 // pred_region
        %s740 = smul.u32 16, %s20
        %p741 = scmp.lt.s32.totalorder %s740, 31
        %s742 = scalar_select %p741, %s740, 31
        %s743 = smul.addr %s742, 8
        %s744 = scalar_lea.vmem %s3, %s743
      $region52: #{_gcn_forward_core.11} parent=47 // pred_fallthru
        _
    $region48: #{_gcn_forward_core.11} parent=5 // pred_fallthru
      _
  $region6: #{_gcn_forward_core.11} parent=0 // loop_footer
    %s13 = sadd.s32 1, %s9
  $region7: #{_gcn_forward_core.11} parent=0 // loop_footer_branch
    %8 = sbr.rel target = $region3
  $region8: #{_gcn_forward_core.11} parent=0 // loop_exit
    _

</llo_original>
